<compile_context>
chip_gen: v6e
topology: v6e:2x2x1
jax: 0.10.0
libtpu: 0.0.40
codegen_flags: <defaults>
</compile_context>

<pallas_src>
import functools

import jax
import jax.numpy as jnp
from jax.experimental import pallas as pl
from jax.experimental.pallas import tpu as pltpu

_EPS = 1e-5
_VMEM_LIMIT = 32 * 1024 * 1024   # safe on v5e/v6e/v7x, above v5e's 16MiB default


# ----------------------------- Pallas kernels --------------------------------
def conv_stats_kernel(x_ref, w_ref, y_ref, sum_ref, ssq_ref, xpad_ref):
    """Binary 3x3 conv (stride 1, pad 1) + per-channel sum / sum-of-squares.

    x_ref   : (bn, H, W, C)   f32 pre-binarization activations (batch tile)
    w_ref   : (9*C, C)        bf16 effective IR weights (kh,kw,cin major order)
    y_ref   : (bn, H, W, C)   conv output tile (bf16 or f32)
    sum_ref : (1, C)          f32 accumulator over the whole batch (resident)
    ssq_ref : (1, C)          f32 accumulator over the whole batch (resident)
    xpad_ref: (bn, H+2, W+2, C) f32 VMEM scratch, zero border
    """
    step = pl.program_id(0)
    bn, H, W, C = x_ref.shape
    M = bn * H * W

    @pl.when(step == 0)
    def _init():
        sum_ref[...] = jnp.zeros_like(sum_ref)
        ssq_ref[...] = jnp.zeros_like(ssq_ref)
        # Zero the zero-padding border ONCE; it never changes afterwards
        # (only the interior is rewritten on every grid step).
        xpad_ref[...] = jnp.zeros_like(xpad_ref)

    x = x_ref[...]
    # torch.sign semantics: sign(0) == 0
    xs = jnp.where(x > 0.0, 1.0, jnp.where(x < 0.0, -1.0, 0.0))
    xpad_ref[:, 1:H + 1, 1:W + 1, :] = xs

    # im2col patch (M, 9C) -> single MXU matmul with K = 9*C.
    # +-1 activations / +-sw (power-of-two) weights are exact in bf16;
    # accumulation stays f32 -> bit-identical result, ~2x MXU throughput.
    patch = jnp.concatenate(
        [xpad_ref[:, kh:kh + H, kw:kw + W, :].reshape(M, C)
         for kh in range(3) for kw in range(3)],
        axis=-1).astype(jnp.bfloat16)

    y = jnp.dot(patch, w_ref[...], preferred_element_type=jnp.float32)  # (M, C)

    y_ref[...] = y.reshape(bn, H, W, C).astype(y_ref.dtype)
    # fused single-pass BN statistics (finalized outside on (1, C) vectors)
    sum_ref[...] += jnp.sum(y, axis=0, keepdims=True)
    ssq_ref[...] += jnp.sum(y * y, axis=0, keepdims=True)


def bn_residual_kernel(y_ref, res_ref, scale_ref, shift_ref, out_ref):
    """out = clip(y * scale + shift + residual, -1, 1); lane-dense (W*C lanes)."""
    y = y_ref[...].astype(jnp.float32)
    out = y * scale_ref[...] + shift_ref[...] + res_ref[...]
    out_ref[...] = jnp.clip(out, -1.0, 1.0)


# ------------------------------ pallas_call glue ------------------------------
def _conv_stats(x_nhwc, w2d, y_dtype, batch_tile):
    N, H, W, C = x_nhwc.shape
    KK = w2d.shape[0]
    grid = (N // batch_tile,)
    return pl.pallas_call(
        conv_stats_kernel,
        grid=grid,
        in_specs=[
            pl.BlockSpec((batch_tile, H, W, C), lambda i: (i, 0, 0, 0)),
            pl.BlockSpec((KK, C), lambda i: (0, 0)),
        ],
        out_specs=(
            pl.BlockSpec((batch_tile, H, W, C), lambda i: (i, 0, 0, 0)),
            pl.BlockSpec((1, C), lambda i: (0, 0)),   # resident accumulator
            pl.BlockSpec((1, C), lambda i: (0, 0)),   # resident accumulator
        ),
        out_shape=(
            jax.ShapeDtypeStruct((N, H, W, C), y_dtype),
            jax.ShapeDtypeStruct((1, C), jnp.float32),
            jax.ShapeDtypeStruct((1, C), jnp.float32),
        ),
        scratch_shapes=[pltpu.VMEM((batch_tile, H + 2, W + 2, C), jnp.float32)],
        compiler_params=pltpu.CompilerParams(
            # BN statistics accumulate across the batch-tile axis -> arbitrary.
            dimension_semantics=("arbitrary",),
            vmem_limit_bytes=_VMEM_LIMIT),
    )(x_nhwc, w2d)


def _bn_residual(y3d, res3d, scale, shift, batch_tile):
    N, H, L = y3d.shape
    grid = (N // batch_tile,)
    return pl.pallas_call(
        bn_residual_kernel,
        grid=grid,
        in_specs=[
            pl.BlockSpec((batch_tile, H, L), lambda i: (i, 0, 0)),
            pl.BlockSpec((batch_tile, H, L), lambda i: (i, 0, 0)),
            pl.BlockSpec((1, L), lambda i: (0, 0)),
            pl.BlockSpec((1, L), lambda i: (0, 0)),
        ],
        out_specs=pl.BlockSpec((batch_tile, H, L), lambda i: (i, 0, 0)),
        out_shape=jax.ShapeDtypeStruct((N, H, L), jnp.float32),
        compiler_params=pltpu.CompilerParams(
            dimension_semantics=("parallel",),   # shards across TCs on v7x
            vmem_limit_bytes=_VMEM_LIMIT),
    )(y3d, res3d, scale, shift)


# ------------------------- IRConv2d weight preparation ------------------------
def ir_weight_transform(w):
    """IR-Net weight processing. w: (Cout, Cin, 3, 3) -> effective binary weight."""
    cout = w.shape[0]
    wf = w.reshape(cout, -1)
    bw = wf - jnp.mean(wf, axis=-1, keepdims=True)
    std = jnp.std(bw, axis=-1, ddof=1, keepdims=True)       # torch.std (unbiased)
    bw = bw / std
    sw = 2.0 ** jnp.round(jnp.log2(jnp.mean(jnp.abs(bw), axis=-1, keepdims=True)))
    return (jnp.sign(bw) * sw).reshape(w.shape)


def _pick_batch_tile(N, H, W, C, budget_bytes=4 * 1024 * 1024):
    """Largest divisor of N whose per-step working set fits a modest budget
    (leaves headroom for double-buffered input/output blocks)."""
    per_elem = H * W * C * 4
    best = 1
    for cand in range(1, N + 1):
        if N % cand == 0 and cand * per_elem * 8 <= budget_bytes:
            best = cand
    return best


# ---------------------------------- wrapper -----------------------------------
@functools.partial(jax.jit, static_argnames=("batch_tile",))
def basic_block_1w1a(x_nchw, w1, w2, g1, b1, g2, b2, batch_tile=None):
    """x_nchw: (N, C, H, W); w1/w2: (C, C, 3, 3); g*/b*: (C,). Returns NCHW."""
    N, C, H, W = x_nchw.shape
    # TODO(synk): downsample shortcut (stride != 1 or in_planes != planes,
    #             option 'A'/'B') is not implemented; identity shortcut only.
    if batch_tile is None:
        batch_tile = _pick_batch_tile(N, H, W, C)
    assert N % batch_tile == 0

    x = jnp.transpose(x_nchw, (0, 2, 3, 1)).astype(jnp.float32)        # NHWC

    def prep_w(w):
        we = ir_weight_transform(w.astype(jnp.float32))                # (Cout,Cin,3,3)
        we = jnp.transpose(we, (2, 3, 1, 0))                           # (kh,kw,Cin,Cout)
        # +-sw with sw a power of two -> exactly representable in bf16.
        return we.reshape(9 * C, C).astype(jnp.bfloat16)

    w1e, w2e = prep_w(w1), prep_w(w2)

    # conv output = sw * k, integer |k| <= 9*C; exact in bf16 iff 9*C <= 256.
    y_dtype = jnp.bfloat16 if 9 * C <= 256 else jnp.float32

    m_total = float(N * H * W)
    L = W * C

    def bn_scale_shift(s, ss, gamma, beta):
        mean = s / m_total
        var = ss / m_total - mean * mean                     # biased batch var
        scale = gamma.reshape(1, C).astype(jnp.float32) * jax.lax.rsqrt(var + _EPS)
        shift = beta.reshape(1, C).astype(jnp.float32) - mean * scale
        # tile per-channel params across W so kernel 2 is lane-dense (W*C lanes)
        return jnp.tile(scale, (1, W)), jnp.tile(shift, (1, W))

    # out = hardtanh(bn1(conv1(sign(x))) + x)
    y1, s1, ss1 = _conv_stats(x, w1e, y_dtype, batch_tile)
    sc1, sh1 = bn_scale_shift(s1, ss1, g1, b1)
    x1 = _bn_residual(y1.reshape(N, H, L), x.reshape(N, H, L), sc1, sh1, batch_tile)

    # out = hardtanh(bn2(conv2(sign(out))) + out)
    y2, s2, ss2 = _conv_stats(x1.reshape(N, H, W, C), w2e, y_dtype, batch_tile)
    sc2, sh2 = bn_scale_shift(s2, ss2, g2, b2)
    out = _bn_residual(y2.reshape(N, H, L), x1, sc2, sh2, batch_tile)

    return jnp.transpose(out.reshape(N, H, W, C), (0, 3, 1, 2))        # NCHW


# ------------------------- plain-JAX reference (check) ------------------------
def reference_block(x_nchw, w1, w2, g1, b1, g2, b2):
    w1e = ir_weight_transform(w1)
    w2e = ir_weight_transform(w2)

    def irconv(a, w_eff):
        ba = jnp.sign(a)
        return jax.lax.conv_general_dilated(
            ba, w_eff, window_strides=(1, 1), padding=((1, 1), (1, 1)),
            dimension_numbers=("NCHW", "OIHW", "NCHW"))

    def bn(v, gamma, beta):
        mean = jnp.mean(v, axis=(0, 2, 3), keepdims=True)
        var = jnp.mean((v - mean) ** 2, axis=(0, 2, 3), keepdims=True)
        return ((v - mean) * jax.lax.rsqrt(var + _EPS)
                * gamma.reshape(1, -1, 1, 1) + beta.reshape(1, -1, 1, 1))

    out = bn(irconv(x_nchw, w1e), g1, b1) + x_nchw
    out = jnp.clip(out, -1.0, 1.0)
    x1 = out
    out = bn(irconv(out, w2e), g2, b2) + x1
    return jnp.clip(out, -1.0, 1.0)


# ----------------------------------- main --------------------------------------
if __name__ == "__main__":
    key = jax.random.PRNGKey(0)
    k_x, k_w1, k_w2 = jax.random.split(key, 3)

    N, C, H, W = 2, 8, 16, 16                 # in_planes == planes, stride=1
    x = jax.random.normal(k_x, (N, C, H, W), dtype=jnp.float32)
    w1 = jax.random.normal(k_w1, (C, C, 3, 3), dtype=jnp.float32) * 0.1
    w2 = jax.random.normal(k_w2, (C, C, 3, 3), dtype=jnp.float32) * 0.1
    g1 = jnp.ones((C,), jnp.float32)
    b1 = jnp.zeros((C,), jnp.float32)
    g2 = jnp.ones((C,), jnp.float32)
    b2 = jnp.zeros((C,), jnp.float32)

    ref = jax.block_until_ready(reference_block(x, w1, w2, g1, b1, g2, b2))

    # batch_tile=1 exercises the multi-step grid + cross-tile BN statistics
    # accumulation; batch_tile=None uses the largest fitting batch tile.
    for bt in (1, None):
        out = jax.block_until_ready(
            basic_block_1w1a(x, w1, w2, g1, b1, g2, b2, batch_tile=bt))
        assert out.shape == (N, C, H, W)
        err = jnp.max(jnp.abs(out - ref))
        assert jnp.allclose(out, ref, atol=1e-3, rtol=1e-3), \
            f"max abs err {err} (batch_tile={bt})"

    print("KERNEL_OK")
</pallas_src>

<mosaic_0001>
module attributes {stable_mosaic.version = 11 : i64} {
  func.func @conv_stats_kernel(%arg0: i32, %arg1: memref<1x16x16x8xf32, #tpu.memory_space<vmem>>, %arg2: memref<72x8xbf16, #tpu.memory_space<vmem>>, %arg3: memref<1x16x16x8xbf16, #tpu.memory_space<vmem>>, %arg4: memref<1x8xf32, #tpu.memory_space<vmem>>, %arg5: memref<1x8xf32, #tpu.memory_space<vmem>>, %arg6: memref<1x18x18x8xf32, #tpu.memory_space<vmem>>) attributes {dimension_semantics = [#tpu.dimension_semantics<arbitrary>], iteration_bounds = array<i64: 2>, scalar_prefetch = 0 : i64, scratch_operands = 1 : i64, tpu.core_type = #tpu.core_type<tc>, window_params = [{transform_indices = @transform_0, window_bounds = array<i64: 1, 16, 16, 8>}, {pipeline_mode = #tpu.pipeline_mode<synchronous>, transform_indices = @transform_1, window_bounds = array<i64: 72, 8>}, {transform_indices = @transform_2, window_bounds = array<i64: 1, 16, 16, 8>}, {pipeline_mode = #tpu.pipeline_mode<synchronous>, transform_indices = @transform_3, window_bounds = array<i64: 1, 8>}, {pipeline_mode = #tpu.pipeline_mode<synchronous>, transform_indices = @transform_4, window_bounds = array<i64: 1, 8>}]} {
    %c0_i32 = arith.constant 0 : i32
    %0 = arith.cmpi eq, %arg0, %c0_i32 : i32
    %1 = arith.extui %0 : i1 to i32
    %c0_i32_0 = arith.constant 0 : i32
    %2 = arith.cmpi ne, %1, %c0_i32_0 : i32
    scf.if %2 {
      %cst_63 = arith.constant 0.000000e+00 : f32
      %50 = vector.broadcast %cst_63 : f32 to vector<1x8xf32>
      %c0_64 = arith.constant 0 : index
      %c0_65 = arith.constant 0 : index
      %51 = vector.load %arg4[%c0_64, %c0_65] : memref<1x8xf32, #tpu.memory_space<vmem>>, vector<1x8xf32>
      tpu.vector_store %arg4[%c0_64, %c0_65], %50 {strides = array<i32>} : memref<1x8xf32, #tpu.memory_space<vmem>>, vector<1x8xf32>,
      %cst_66 = arith.constant 0.000000e+00 : f32
      %52 = vector.broadcast %cst_66 : f32 to vector<1x8xf32>
      %c0_67 = arith.constant 0 : index
      %c0_68 = arith.constant 0 : index
      %53 = vector.load %arg5[%c0_67, %c0_68] : memref<1x8xf32, #tpu.memory_space<vmem>>, vector<1x8xf32>
      tpu.vector_store %arg5[%c0_67, %c0_68], %52 {strides = array<i32>} : memref<1x8xf32, #tpu.memory_space<vmem>>, vector<1x8xf32>,
      %cst_69 = arith.constant 0.000000e+00 : f32
      %54 = vector.broadcast %cst_69 : f32 to vector<1x18x18x8xf32>
      %c0_70 = arith.constant 0 : index
      %c0_71 = arith.constant 0 : index
      %c0_72 = arith.constant 0 : index
      %c0_73 = arith.constant 0 : index
      %55 = vector.load %arg6[%c0_70, %c0_71, %c0_72, %c0_73] : memref<1x18x18x8xf32, #tpu.memory_space<vmem>>, vector<1x18x18x8xf32>
      tpu.vector_store %arg6[%c0_70, %c0_71, %c0_72, %c0_73], %54 {strides = array<i32>} : memref<1x18x18x8xf32, #tpu.memory_space<vmem>>, vector<1x18x18x8xf32>,
    } else {
    }
    %c0 = arith.constant 0 : index
    %c0_1 = arith.constant 0 : index
    %c0_2 = arith.constant 0 : index
    %c0_3 = arith.constant 0 : index
    %3 = vector.load %arg1[%c0, %c0_1, %c0_2, %c0_3] : memref<1x16x16x8xf32, #tpu.memory_space<vmem>>, vector<1x16x16x8xf32>
    %cst = arith.constant 0.000000e+00 : f32
    %4 = vector.broadcast %cst : f32 to vector<1x16x16x8xf32>
    %5 = arith.cmpf ogt, %3, %4 : vector<1x16x16x8xf32>
    %cst_4 = arith.constant 0.000000e+00 : f32
    %6 = vector.broadcast %cst_4 : f32 to vector<1x16x16x8xf32>
    %7 = arith.cmpf olt, %3, %6 : vector<1x16x16x8xf32>
    %cst_5 = arith.constant -1.000000e+00 : f32
    %cst_6 = arith.constant 0.000000e+00 : f32
    %8 = vector.broadcast %cst_5 : f32 to vector<1x16x16x8xf32>
    %9 = vector.broadcast %cst_6 : f32 to vector<1x16x16x8xf32>
    %10 = arith.select %7, %8, %9 : vector<1x16x16x8xi1>, vector<1x16x16x8xf32>
    %cst_7 = arith.constant 1.000000e+00 : f32
    %11 = vector.broadcast %cst_7 : f32 to vector<1x16x16x8xf32>
    %12 = arith.select %5, %11, %10 : vector<1x16x16x8xi1>, vector<1x16x16x8xf32>
    %c0_8 = arith.constant 0 : index
    %c1 = arith.constant 1 : index
    %c1_9 = arith.constant 1 : index
    %c0_10 = arith.constant 0 : index
    %13 = vector.load %arg6[%c0_8, %c1, %c1_9, %c0_10] : memref<1x18x18x8xf32, #tpu.memory_space<vmem>>, vector<1x16x16x8xf32>
    tpu.vector_store %arg6[%c0_8, %c1, %c1_9, %c0_10], %12 {strides = array<i32>} : memref<1x18x18x8xf32, #tpu.memory_space<vmem>>, vector<1x16x16x8xf32>,
    %c0_11 = arith.constant 0 : index
    %c0_12 = arith.constant 0 : index
    %c0_13 = arith.constant 0 : index
    %c0_14 = arith.constant 0 : index
    %14 = vector.load %arg6[%c0_11, %c0_12, %c0_13, %c0_14] : memref<1x18x18x8xf32, #tpu.memory_space<vmem>>, vector<1x16x16x8xf32>
    %15 = vector.shape_cast %14 : vector<1x16x16x8xf32> to vector<256x8xf32>
    %c0_15 = arith.constant 0 : index
    %c0_16 = arith.constant 0 : index
    %c1_17 = arith.constant 1 : index
    %c0_18 = arith.constant 0 : index
    %16 = vector.load %arg6[%c0_15, %c0_16, %c1_17, %c0_18] : memref<1x18x18x8xf32, #tpu.memory_space<vmem>>, vector<1x16x16x8xf32>
    %17 = vector.shape_cast %16 : vector<1x16x16x8xf32> to vector<256x8xf32>
    %c0_19 = arith.constant 0 : index
    %c0_20 = arith.constant 0 : index
    %c2 = arith.constant 2 : index
    %c0_21 = arith.constant 0 : index
    %18 = vector.load %arg6[%c0_19, %c0_20, %c2, %c0_21] : memref<1x18x18x8xf32, #tpu.memory_space<vmem>>, vector<1x16x16x8xf32>
    %19 = vector.shape_cast %18 : vector<1x16x16x8xf32> to vector<256x8xf32>
    %c0_22 = arith.constant 0 : index
    %c1_23 = arith.constant 1 : index
    %c0_24 = arith.constant 0 : index
    %c0_25 = arith.constant 0 : index
    %20 = vector.load %arg6[%c0_22, %c1_23, %c0_24, %c0_25] : memref<1x18x18x8xf32, #tpu.memory_space<vmem>>, vector<1x16x16x8xf32>
    %21 = vector.shape_cast %20 : vector<1x16x16x8xf32> to vector<256x8xf32>
    %c0_26 = arith.constant 0 : index
    %c1_27 = arith.constant 1 : index
    %c1_28 = arith.constant 1 : index
    %c0_29 = arith.constant 0 : index
    %22 = vector.load %arg6[%c0_26, %c1_27, %c1_28, %c0_29] : memref<1x18x18x8xf32, #tpu.memory_space<vmem>>, vector<1x16x16x8xf32>
    %23 = vector.shape_cast %22 : vector<1x16x16x8xf32> to vector<256x8xf32>
    %c0_30 = arith.constant 0 : index
    %c1_31 = arith.constant 1 : index
    %c2_32 = arith.constant 2 : index
    %c0_33 = arith.constant 0 : index
    %24 = vector.load %arg6[%c0_30, %c1_31, %c2_32, %c0_33] : memref<1x18x18x8xf32, #tpu.memory_space<vmem>>, vector<1x16x16x8xf32>
    %25 = vector.shape_cast %24 : vector<1x16x16x8xf32> to vector<256x8xf32>
    %c0_34 = arith.constant 0 : index
    %c2_35 = arith.constant 2 : index
    %c0_36 = arith.constant 0 : index
    %c0_37 = arith.constant 0 : index
    %26 = vector.load %arg6[%c0_34, %c2_35, %c0_36, %c0_37] : memref<1x18x18x8xf32, #tpu.memory_space<vmem>>, vector<1x16x16x8xf32>
    %27 = vector.shape_cast %26 : vector<1x16x16x8xf32> to vector<256x8xf32>
    %c0_38 = arith.constant 0 : index
    %c2_39 = arith.constant 2 : index
    %c1_40 = arith.constant 1 : index
    %c0_41 = arith.constant 0 : index
    %28 = vector.load %arg6[%c0_38, %c2_39, %c1_40, %c0_41] : memref<1x18x18x8xf32, #tpu.memory_space<vmem>>, vector<1x16x16x8xf32>
    %29 = vector.shape_cast %28 : vector<1x16x16x8xf32> to vector<256x8xf32>
    %c0_42 = arith.constant 0 : index
    %c2_43 = arith.constant 2 : index
    %c2_44 = arith.constant 2 : index
    %c0_45 = arith.constant 0 : index
    %30 = vector.load %arg6[%c0_42, %c2_43, %c2_44, %c0_45] : memref<1x18x18x8xf32, #tpu.memory_space<vmem>>, vector<1x16x16x8xf32>
    %31 = vector.shape_cast %30 : vector<1x16x16x8xf32> to vector<256x8xf32>
    %32 = tpu.concatenate %15, %17, %19, %21, %23, %25, %27, %29, %31 in 1 : vector<256x8xf32>, vector<256x8xf32>, vector<256x8xf32>, vector<256x8xf32>, vector<256x8xf32>, vector<256x8xf32>, vector<256x8xf32>, vector<256x8xf32>, vector<256x8xf32> -> vector<256x72xf32>
    %33 = arith.truncf %32 : vector<256x72xf32> to vector<256x72xbf16>
    %c0_46 = arith.constant 0 : index
    %c0_47 = arith.constant 0 : index
    %34 = vector.load %arg2[%c0_46, %c0_47] : memref<72x8xbf16, #tpu.memory_space<vmem>>, vector<72x8xbf16>
    %cst_48 = arith.constant dense<0.000000e+00> : vector<256x8xf32>
    %35 = tpu.matmul %33, %34, %cst_48 {dimension_numbers = #tpu.dot_dimension_numbers<[1], [0], [0], [1], [0, 0, 1, 1], [], []>} : vector<256x72xbf16>, vector<72x8xbf16>, vector<256x8xf32> -> vector<256x8xf32>
    %36 = vector.shape_cast %35 : vector<256x8xf32> to vector<1x16x16x8xf32>
    %37 = arith.truncf %36 : vector<1x16x16x8xf32> to vector<1x16x16x8xbf16>
    %c0_49 = arith.constant 0 : index
    %c0_50 = arith.constant 0 : index
    %c0_51 = arith.constant 0 : index
    %c0_52 = arith.constant 0 : index
    %38 = vector.load %arg3[%c0_49, %c0_50, %c0_51, %c0_52] : memref<1x16x16x8xbf16, #tpu.memory_space<vmem>>, vector<1x16x16x8xbf16>
    tpu.vector_store %arg3[%c0_49, %c0_50, %c0_51, %c0_52], %37 {strides = array<i32>} : memref<1x16x16x8xbf16, #tpu.memory_space<vmem>>, vector<1x16x16x8xbf16>,
    %c0_53 = arith.constant 0 : index
    %c0_54 = arith.constant 0 : index
    %39 = vector.load %arg4[%c0_53, %c0_54] : memref<1x8xf32, #tpu.memory_space<vmem>>, vector<1x8xf32>
    %cst_55 = arith.constant dense<0.000000e+00> : vector<8xf32>
    %40 = vector.multi_reduction <add>, %35, %cst_55 [0] : vector<256x8xf32> to vector<8xf32>
    %41 = vector.shape_cast %40 : vector<8xf32> to vector<1x8xf32>
    %42 = arith.addf %39, %41 : vector<1x8xf32>
    %c0_56 = arith.constant 0 : index
    %c0_57 = arith.constant 0 : index
    %43 = vector.load %arg4[%c0_56, %c0_57] : memref<1x8xf32, #tpu.memory_space<vmem>>, vector<1x8xf32>
    tpu.vector_store %arg4[%c0_56, %c0_57], %42 {strides = array<i32>} : memref<1x8xf32, #tpu.memory_space<vmem>>, vector<1x8xf32>,
    %c0_58 = arith.constant 0 : index
    %c0_59 = arith.constant 0 : index
    %44 = vector.load %arg5[%c0_58, %c0_59] : memref<1x8xf32, #tpu.memory_space<vmem>>, vector<1x8xf32>
    %45 = arith.mulf %35, %35 : vector<256x8xf32>
    %cst_60 = arith.constant dense<0.000000e+00> : vector<8xf32>
    %46 = vector.multi_reduction <add>, %45, %cst_60 [0] : vector<256x8xf32> to vector<8xf32>
    %47 = vector.shape_cast %46 : vector<8xf32> to vector<1x8xf32>
    %48 = arith.addf %44, %47 : vector<1x8xf32>
    %c0_61 = arith.constant 0 : index
    %c0_62 = arith.constant 0 : index
    %49 = vector.load %arg5[%c0_61, %c0_62] : memref<1x8xf32, #tpu.memory_space<vmem>>, vector<1x8xf32>
    tpu.vector_store %arg5[%c0_61, %c0_62], %48 {strides = array<i32>} : memref<1x8xf32, #tpu.memory_space<vmem>>, vector<1x8xf32>,
    return
  }
  func.func @transform_0(%arg0: i32) -> (i32, i32, i32, i32) {
    %c0_i32 = arith.constant 0 : i32
    %c0_i32_0 = arith.constant 0 : i32
    %c0_i32_1 = arith.constant 0 : i32
    %c0_i32_2 = arith.constant 0 : i32
    return %arg0, %c0_i32, %c0_i32_0, %c0_i32_1 : i32, i32, i32, i32
  }
  func.func @transform_1(%arg0: i32) -> (i32, i32) {
    %c0_i32 = arith.constant 0 : i32
    %c0_i32_0 = arith.constant 0 : i32
    %c0_i32_1 = arith.constant 0 : i32
    return %c0_i32, %c0_i32_0 : i32, i32
  }
  func.func @transform_2(%arg0: i32) -> (i32, i32, i32, i32) {
    %c0_i32 = arith.constant 0 : i32
    %c0_i32_0 = arith.constant 0 : i32
    %c0_i32_1 = arith.constant 0 : i32
    %c0_i32_2 = arith.constant 0 : i32
    return %arg0, %c0_i32, %c0_i32_0, %c0_i32_1 : i32, i32, i32, i32
  }
  func.func @transform_3(%arg0: i32) -> (i32, i32) {
    %c0_i32 = arith.constant 0 : i32
    %c0_i32_0 = arith.constant 0 : i32
    %c0_i32_1 = arith.constant 0 : i32
    return %c0_i32, %c0_i32_0 : i32, i32
  }
  func.func @transform_4(%arg0: i32) -> (i32, i32) {
    %c0_i32 = arith.constant 0 : i32
    %c0_i32_0 = arith.constant 0 : i32
    %c0_i32_1 = arith.constant 0 : i32
    return %c0_i32, %c0_i32_0 : i32, i32
  }
}

module attributes {stable_mosaic.version = 11 : i64} {
  func.func @bn_residual_kernel(%arg0: i32, %arg1: memref<1x16x128xbf16, #tpu.memory_space<vmem>>, %arg2: memref<1x16x128xf32, #tpu.memory_space<vmem>>, %arg3: memref<1x128xf32, #tpu.memory_space<vmem>>, %arg4: memref<1x128xf32, #tpu.memory_space<vmem>>, %arg5: memref<1x16x128xf32, #tpu.memory_space<vmem>>) attributes {dimension_semantics = [#tpu.dimension_semantics<parallel>], iteration_bounds = array<i64: 2>, scalar_prefetch = 0 : i64, scratch_operands = 0 : i64, tpu.core_type = #tpu.core_type<tc>, window_params = [{transform_indices = @transform_0, window_bounds = array<i64: 1, 16, 128>}, {transform_indices = @transform_1, window_bounds = array<i64: 1, 16, 128>}, {pipeline_mode = #tpu.pipeline_mode<synchronous>, transform_indices = @transform_2, window_bounds = array<i64: 1, 128>}, {pipeline_mode = #tpu.pipeline_mode<synchronous>, transform_indices = @transform_3, window_bounds = array<i64: 1, 128>}, {transform_indices = @transform_4, window_bounds = array<i64: 1, 16, 128>}]} {
    %c0 = arith.constant 0 : index
    %c0_0 = arith.constant 0 : index
    %c0_1 = arith.constant 0 : index
    %0 = vector.load %arg1[%c0, %c0_0, %c0_1] : memref<1x16x128xbf16, #tpu.memory_space<vmem>>, vector<1x16x128xbf16>
    %1 = arith.extf %0 : vector<1x16x128xbf16> to vector<1x16x128xf32>
    %c0_2 = arith.constant 0 : index
    %c0_3 = arith.constant 0 : index
    %2 = vector.load %arg3[%c0_2, %c0_3] : memref<1x128xf32, #tpu.memory_space<vmem>>, vector<1x128xf32>
    %3 = vector.shape_cast %2 : vector<1x128xf32> to vector<1x1x128xf32>
    %4 = vector.broadcast %3 : vector<1x1x128xf32> to vector<1x16x128xf32>
    %5 = arith.mulf %1, %4 : vector<1x16x128xf32>
    %c0_4 = arith.constant 0 : index
    %c0_5 = arith.constant 0 : index
    %6 = vector.load %arg4[%c0_4, %c0_5] : memref<1x128xf32, #tpu.memory_space<vmem>>, vector<1x128xf32>
    %7 = vector.shape_cast %6 : vector<1x128xf32> to vector<1x1x128xf32>
    %8 = vector.broadcast %7 : vector<1x1x128xf32> to vector<1x16x128xf32>
    %9 = arith.addf %5, %8 : vector<1x16x128xf32>
    %c0_6 = arith.constant 0 : index
    %c0_7 = arith.constant 0 : index
    %c0_8 = arith.constant 0 : index
    %10 = vector.load %arg2[%c0_6, %c0_7, %c0_8] : memref<1x16x128xf32, #tpu.memory_space<vmem>>, vector<1x16x128xf32>
    %11 = arith.addf %9, %10 : vector<1x16x128xf32>
    %cst = arith.constant -1.000000e+00 : f32
    %cst_9 = arith.constant 1.000000e+00 : f32
    %12 = vector.broadcast %cst : f32 to vector<1x16x128xf32>
    %13 = arith.maximumf %12, %11 : vector<1x16x128xf32>
    %14 = vector.broadcast %cst_9 : f32 to vector<1x16x128xf32>
    %15 = arith.minimumf %14, %13 : vector<1x16x128xf32>
    %c0_10 = arith.constant 0 : index
    %c0_11 = arith.constant 0 : index
    %c0_12 = arith.constant 0 : index
    %16 = vector.load %arg5[%c0_10, %c0_11, %c0_12] : memref<1x16x128xf32, #tpu.memory_space<vmem>>, vector<1x16x128xf32>
    tpu.vector_store %arg5[%c0_10, %c0_11, %c0_12], %15 {strides = array<i32>} : memref<1x16x128xf32, #tpu.memory_space<vmem>>, vector<1x16x128xf32>,
    return
  }
  func.func @transform_0(%arg0: i32) -> (i32, i32, i32) {
    %c0_i32 = arith.constant 0 : i32
    %c0_i32_0 = arith.constant 0 : i32
    %c0_i32_1 = arith.constant 0 : i32
    return %arg0, %c0_i32, %c0_i32_0 : i32, i32, i32
  }
  func.func @transform_1(%arg0: i32) -> (i32, i32, i32) {
    %c0_i32 = arith.constant 0 : i32
    %c0_i32_0 = arith.constant 0 : i32
    %c0_i32_1 = arith.constant 0 : i32
    return %arg0, %c0_i32, %c0_i32_0 : i32, i32, i32
  }
  func.func @transform_2(%arg0: i32) -> (i32, i32) {
    %c0_i32 = arith.constant 0 : i32
    %c0_i32_0 = arith.constant 0 : i32
    %c0_i32_1 = arith.constant 0 : i32
    return %c0_i32, %c0_i32_0 : i32, i32
  }
  func.func @transform_3(%arg0: i32) -> (i32, i32) {
    %c0_i32 = arith.constant 0 : i32
    %c0_i32_0 = arith.constant 0 : i32
    %c0_i32_1 = arith.constant 0 : i32
    return %c0_i32, %c0_i32_0 : i32, i32
  }
  func.func @transform_4(%arg0: i32) -> (i32, i32, i32) {
    %c0_i32 = arith.constant 0 : i32
    %c0_i32_0 = arith.constant 0 : i32
    %c0_i32_1 = arith.constant 0 : i32
    return %arg0, %c0_i32, %c0_i32_0 : i32, i32, i32
  }
}

</mosaic_0001>

<llo_original>
// kernel: basic_block_1w1a.5
$region0: #{basic_block_1w1a.5}
  #allocation0 [shape = 'u32[]', space=smem, size = 0x4, offset = 0x4, fixed_abs, tag = 'smem constant byte address 0x4 - core index']
  #allocation1 [shape = 'u32[144,128]{1,0:T(1,128)}', space=vmem, size = 0x12000, scoped, tag = 'internal scratch']
  %s0 = inlined_call_operand.vmem [shape: bf16[2,16,128], index: 0, kind: input, shape index: {}]
  %s1 = inlined_call_operand.vmem [shape: f32[2,16,128], index: 1, kind: input, shape index: {}]
  %s2 = inlined_call_operand.vmem [shape: f32[1,128], index: 2, kind: input, shape index: {}]
  %s3 = inlined_call_operand.vmem [shape: f32[1,128], index: 3, kind: input, shape index: {}]
  %s4 = inlined_call_operand.vmem [shape: f32[2,16,128], index: 4, kind: output, shape index: {}]
  %s5 = sld [smem:[#allocation0]]
  $region49: #{basic_block_1w1a.5} parent=0
    _
  %s7 = ssub.s32 1, %s5
  %s8 = scalar_select 0, %s7, %s5
  loop: start=0, step=1, limit=4
  $region2: #{basic_block_1w1a.5} parent=0 // loop_pre_header
    _
  $region3: #{basic_block_1w1a.5} parent=0 // loop_header
    %s10 = sphi 0, %s14
    %p11 = scmp.ge.s32.totalorder %s10, 4
    %s20 = sphi 0, %s22
    %s23 = sphi 0, %s20
    %s24 = sphi 0, %s23
    %s40 = sphi 0, %s24
    %s46 = sphi 0, %s48
    %s49 = sphi 0, %s46
    %s50 = sphi 0, %s49
    %s66 = sphi 0, %s50
    %s70 = sphi 0, %s70
    %s72 = sphi 0, %s70
    %s73 = sphi 0, %s72
    %s87 = sphi 0, %s73
    %s91 = sphi 0, %s91
    %s93 = sphi 0, %s91
    %s94 = sphi 0, %s93
    %s108 = sphi 0, %s94
    %s114 = sphi 0, %s116
    %s117 = sphi 0, %s114
    %s118 = sphi 0, %s117
    %s134 = sphi 0, %s118
  $region4: #{basic_block_1w1a.5} parent=0 // loop_header_branch
    %13 = sbr.rel (%p11) target = $region8
  $region5: #{basic_block_1w1a.5} parent=0 // loop_body
    %s15 = ssub.s32 %s10, 1
    %s16 = ssub.s32 %s10, 2
    %s17 = sadd.s32 %s10, 1
    %s18 = ssub.s32 %s10, %s17
    %p19 = scmp.eq.s32.totalorder %s18, 0
    %s21 = sadd.s32 %s20, 1
    %s22 = scalar_select %p19, %s20, %s21
    %p25 = pneg %p19
    %p26 = scmp.eq.s32.totalorder %s10, 1
    %p27 = por %p25, %p26
    %p28 = scmp.ne.s32.totalorder %s20, %s23
    %p29 = scmp.eq.s32.totalorder %s10, 0
    %p30 = por %p28, %p29
    %p31 = scmp.ne.s32.totalorder %s20, %s23
    %p32 = scmp.eq.s32.totalorder %s15, 1
    %p33 = por %p31, %p32
    %p34 = scmp.ne.s32.totalorder %s23, %s24
    %p35 = scmp.eq.s32.totalorder %s15, 0
    %p36 = por %p34, %p35
    %p37 = scmp.ne.s32.totalorder %s23, %s24
    %p38 = scmp.eq.s32.totalorder %s16, 1
    %p39 = por %p37, %p38
    %p41 = scmp.ne.s32.totalorder %s24, %s40
    %p42 = scmp.eq.s32.totalorder %s16, 0
    %p43 = por %p41, %p42
    %s44 = ssub.s32 %s10, %s17
    %p45 = scmp.eq.s32.totalorder %s44, 0
    %s47 = sadd.s32 %s46, 1
    %s48 = scalar_select %p45, %s46, %s47
    %p51 = pneg %p45
    %p52 = scmp.eq.s32.totalorder %s10, 1
    %p53 = por %p51, %p52
    %p54 = scmp.ne.s32.totalorder %s46, %s49
    %p55 = scmp.eq.s32.totalorder %s10, 0
    %p56 = por %p54, %p55
    %p57 = scmp.ne.s32.totalorder %s46, %s49
    %p58 = scmp.eq.s32.totalorder %s15, 1
    %p59 = por %p57, %p58
    %p60 = scmp.ne.s32.totalorder %s49, %s50
    %p61 = scmp.eq.s32.totalorder %s15, 0
    %p62 = por %p60, %p61
    %p63 = scmp.ne.s32.totalorder %s49, %s50
    %p64 = scmp.eq.s32.totalorder %s16, 1
    %p65 = por %p63, %p64
    %p67 = scmp.ne.s32.totalorder %s50, %s66
    %p68 = scmp.eq.s32.totalorder %s16, 0
    %p69 = por %p67, %p68
    %s71 = sadd.s32 %s70, 1
    %p74 = scmp.eq.s32.totalorder %s10, 1
    %p75 = scmp.ne.s32.totalorder %s70, %s72
    %p76 = scmp.eq.s32.totalorder %s10, 0
    %p77 = por %p75, %p76
    %p78 = scmp.ne.s32.totalorder %s70, %s72
    %p79 = scmp.eq.s32.totalorder %s15, 1
    %p80 = por %p78, %p79
    %p81 = scmp.ne.s32.totalorder %s72, %s73
    %p82 = scmp.eq.s32.totalorder %s15, 0
    %p83 = por %p81, %p82
    %p84 = scmp.ne.s32.totalorder %s72, %s73
    %p85 = scmp.eq.s32.totalorder %s16, 1
    %p86 = por %p84, %p85
    %p88 = scmp.ne.s32.totalorder %s73, %s87
    %p89 = scmp.eq.s32.totalorder %s16, 0
    %p90 = por %p88, %p89
    %s92 = sadd.s32 %s91, 1
    %p95 = scmp.eq.s32.totalorder %s10, 1
    %p96 = scmp.ne.s32.totalorder %s91, %s93
    %p97 = scmp.eq.s32.totalorder %s10, 0
    %p98 = por %p96, %p97
    %p99 = scmp.ne.s32.totalorder %s91, %s93
    %p100 = scmp.eq.s32.totalorder %s15, 1
    %p101 = por %p99, %p100
    %p102 = scmp.ne.s32.totalorder %s93, %s94
    %p103 = scmp.eq.s32.totalorder %s15, 0
    %p104 = por %p102, %p103
    %p105 = scmp.ne.s32.totalorder %s93, %s94
    %p106 = scmp.eq.s32.totalorder %s16, 1
    %p107 = por %p105, %p106
    %p109 = scmp.ne.s32.totalorder %s94, %s108
    %p110 = scmp.eq.s32.totalorder %s16, 0
    %p111 = por %p109, %p110
    %s112 = ssub.s32 %s10, %s17
    %p113 = scmp.eq.s32.totalorder %s112, 0
    %s115 = sadd.s32 %s114, 1
    %s116 = scalar_select %p113, %s114, %s115
    %p119 = pneg %p113
    %p120 = scmp.eq.s32.totalorder %s10, 1
    %p121 = por %p119, %p120
    %p122 = scmp.ne.s32.totalorder %s114, %s117
    %p123 = scmp.eq.s32.totalorder %s10, 0
    %p124 = por %p122, %p123
    %p125 = scmp.ne.s32.totalorder %s114, %s117
    %p126 = scmp.eq.s32.totalorder %s15, 1
    %p127 = por %p125, %p126
    %p128 = scmp.ne.s32.totalorder %s117, %s118
    %p129 = scmp.eq.s32.totalorder %s15, 0
    %p130 = por %p128, %p129
    %p131 = scmp.ne.s32.totalorder %s117, %s118
    %p132 = scmp.eq.s32.totalorder %s16, 1
    %p133 = por %p131, %p132
    %p135 = scmp.ne.s32.totalorder %s118, %s134
    %p136 = scmp.eq.s32.totalorder %s16, 0
    %p137 = por %p135, %p136
    %p138 = scmp.le.s32.totalorder 1, %s10
    %p139 = scmp.lt.s32.totalorder %s10, 3
    %p140 = pnand %p138, %p139
    %p141 = pneg %p140
    // Predicated region
    $region9: #{basic_block_1w1a.5} parent=5 // pred_check
      _
    $region10: #{basic_block_1w1a.5} parent=5 // pred_check_branch
      %143 = sbr.rel (%p140) target = $region12
    $region11: #{basic_block_1w1a.5} parent=5 // pred_region
      %s144 = ssub.s32 %s10, 1
      // Predicated region
      $region13: #{basic_block_1w1a.5} parent=11 // pred_check
        %p145 = pneg %p83
      $region14: #{basic_block_1w1a.5} parent=11 // pred_check_branch
        %147 = sbr.rel (%p145) target = $region16
      $region15: #{basic_block_1w1a.5} parent=11 // pred_region
        _
      $region16: #{basic_block_1w1a.5} parent=11 // pred_fallthru
        _
      // Predicated region
      $region17: #{basic_block_1w1a.5} parent=11 // pred_check
        %p148 = pneg %p104
      $region18: #{basic_block_1w1a.5} parent=11 // pred_check_branch
        %150 = sbr.rel (%p148) target = $region20
      $region19: #{basic_block_1w1a.5} parent=11 // pred_region
        _
      $region20: #{basic_block_1w1a.5} parent=11 // pred_fallthru
        _
    $region12: #{basic_block_1w1a.5} parent=5 // pred_fallthru
      _
    %p151 = scmp.lt.s32.totalorder %s10, 2
    // Predicated region
    $region21: #{basic_block_1w1a.5} parent=5 // pred_check
      %p152 = pneg %p151
    $region22: #{basic_block_1w1a.5} parent=5 // pred_check_branch
      %154 = sbr.rel (%p152) target = $region24
    $region23: #{basic_block_1w1a.5} parent=5 // pred_region
      // Predicated region
      $region25: #{basic_block_1w1a.5} parent=23 // pred_check
        %p155 = pneg %p30
      $region26: #{basic_block_1w1a.5} parent=23 // pred_check_branch
        %157 = sbr.rel (%p155) target = $region28
      $region27: #{basic_block_1w1a.5} parent=23 // pred_region
        %p158 = scmp.lt.s32.totalorder %s10, 1
        %s159 = scalar_select %p158, %s10, 1
        %s160 = smul.addr %s159, 2
        %s161 = smul.addr %s160, 4
        %s162 = scalar_lea.vmem %s0, %s161
      $region28: #{basic_block_1w1a.5} parent=23 // pred_fallthru
        _
      // Predicated region
      $region29: #{basic_block_1w1a.5} parent=23 // pred_check
        %p163 = pneg %p56
      $region30: #{basic_block_1w1a.5} parent=23 // pred_check_branch
        %165 = sbr.rel (%p163) target = $region32
      $region31: #{basic_block_1w1a.5} parent=23 // pred_region
        %p166 = scmp.lt.s32.totalorder %s10, 1
        %s167 = scalar_select %p166, %s10, 1
        %s168 = smul.addr %s167, 2
        %s169 = smul.addr %s168, 8
        %s170 = scalar_lea.vmem %s1, %s169
      $region32: #{basic_block_1w1a.5} parent=23 // pred_fallthru
        _
    $region24: #{basic_block_1w1a.5} parent=5 // pred_fallthru
      _
    %p171 = scmp.le.s32.totalorder 1, %s10
    %p172 = scmp.lt.s32.totalorder %s10, 3
    %p173 = pnand %p171, %p172
    %p174 = pneg %p173
    // Predicated region
    $region33: #{basic_block_1w1a.5} parent=5 // pred_check
      _
    $region34: #{basic_block_1w1a.5} parent=5 // pred_check_branch
      %176 = sbr.rel (%p173) target = $region36
    $region35: #{basic_block_1w1a.5} parent=5 // pred_region
      %s177 = ssub.s32 %s10, 1
      %p178 = scmp.lt.s32.totalorder %s15, 1
      %s179 = scalar_select %p178, %s15, 1
      %s180 = smul.addr %s179, 2
      %s181 = smul.addr %s180, 4
      %s182 = scalar_lea.vmem %s0, %s181
      %p183 = pneg %p36
      %p184 = pneg %p33
      %p185 = scmp.lt.s32.totalorder %s15, 1
      %s186 = scalar_select %p185, %s15, 1
      %s187 = smul.addr %s186, 2
      %s188 = smul.addr %s187, 8
      %s189 = scalar_lea.vmem %s1, %s188
      %p190 = pneg %p62
      %p191 = pneg %p59
      %p192 = pneg %p83
      %p193 = pneg %p80
      %p194 = pneg %p104
      %p195 = pneg %p101
      %p196 = pneg %p130
      %p197 = pneg %p127
      %p198 = scmp.lt.s32.totalorder %s15, 1
      %s199 = scalar_select %p198, %s15, 1
      %s200 = smul.addr %s199, 2
      %s201 = smul.addr %s200, 8
      %s202 = scalar_lea.vmem %s4, %s201
      %p203 = scmp.lt.s32.totalorder %s15, 1
      %s204 = scalar_select %p203, %s15, 1
      %s205 = smul.addr %s204, 2
      %s206 = smul.addr %s205, 4
      %s207 = scalar_lea.vmem %s0, %s206
      %p208 = scmp.lt.s32.totalorder %s15, 1
      %s209 = scalar_select %p208, %s15, 1
      %s210 = smul.addr %s209, 2
      %s211 = smul.addr %s210, 8
      %s212 = scalar_lea.vmem %s1, %s211
      %p213 = scmp.lt.s32.totalorder %s15, 1
      %s214 = scalar_select %p213, %s15, 1
      %s215 = smul.addr %s214, 2
      %s216 = smul.addr %s215, 8
      %s217 = scalar_lea.vmem %s4, %s216
      %v218 = vld [vmem:[%s207] sm:$0xf]
      %v219 = vld [vmem:[%s207 + $0x4] sm:$0xf]
      %v220 = vunpack.c.l.bf16 %v218
      %v221 = vunpack.c.l.bf16 %v219
      %v222 = vld [vmem:[%s2] sm:$0x1]
      %v224 = vlaneseq
      %v225 = vshrl.u32 %v224, 7
      %v226 = vsub.s32 0, %v225
      %v227 = vrot.slane %v222, %v226
      %v229 = vmul.f32 %v220, %v227
      %v230 = vmul.f32 %v221, %v227
      %v231 = vld [vmem:[%s3] sm:$0x1]
      %v233 = vlaneseq
      %v234 = vshrl.u32 %v233, 7
      %v235 = vsub.s32 0, %v234
      %v236 = vrot.slane %v231, %v235
      %v238 = vadd.f32 %v229, %v236
      %v239 = vadd.f32 %v230, %v236
      %v240 = vld [vmem:[%s212] sm:$0xff]
      %v241 = vld [vmem:[%s212 + $0x8] sm:$0xff]
      %v242 = vadd.f32 %v238, %v240
      %v243 = vadd.f32 %v239, %v241
      %v244 = vmax.f32 %v242, -1.0
      %v245 = vmax.f32 %v243, -1.0
      %v246 = vmin.f32 %v244, 1.0
      %v247 = vmin.f32 %v245, 1.0
      %248 = vst [vmem:[%s217] sm:$0xff] %v246
      %249 = vst [vmem:[%s217 + $0x8] sm:$0xff] %v247
      %p250 = scmp.lt.s32.totalorder %s15, 1
      %s251 = scalar_select %p250, %s15, 1
      %s252 = smul.addr %s251, 2
      %s253 = smul.addr %s252, 8
      %s254 = scalar_lea.vmem %s4, %s253
      // Predicated region
      $region37: #{basic_block_1w1a.5} parent=35 // pred_check
        %p255 = pneg %p127
      $region38: #{basic_block_1w1a.5} parent=35 // pred_check_branch
        %257 = sbr.rel (%p255) target = $region40
      $region39: #{basic_block_1w1a.5} parent=35 // pred_region
        _
      $region40: #{basic_block_1w1a.5} parent=35 // pred_fallthru
        _
    $region36: #{basic_block_1w1a.5} parent=5 // pred_fallthru
      _
    %p258 = scmp.le.s32.totalorder 2, %s10
    // Predicated region
    $region41: #{basic_block_1w1a.5} parent=5 // pred_check
      %p259 = pneg %p258
    $region42: #{basic_block_1w1a.5} parent=5 // pred_check_branch
      %261 = sbr.rel (%p259) target = $region44
    $region43: #{basic_block_1w1a.5} parent=5 // pred_region
      %s262 = ssub.s32 %s10, 2
      // Predicated region
      $region45: #{basic_block_1w1a.5} parent=43 // pred_check
        %p263 = pneg %p133
      $region46: #{basic_block_1w1a.5} parent=43 // pred_check_branch
        %265 = sbr.rel (%p263) target = $region48
      $region47: #{basic_block_1w1a.5} parent=43 // pred_region
        %p266 = scmp.lt.s32.totalorder %s16, 1
        %s267 = scalar_select %p266, %s16, 1
        %s268 = smul.addr %s267, 2
        %s269 = smul.addr %s268, 8
        %s270 = scalar_lea.vmem %s4, %s269
      $region48: #{basic_block_1w1a.5} parent=43 // pred_fallthru
        _
    $region44: #{basic_block_1w1a.5} parent=5 // pred_fallthru
      _
  $region6: #{basic_block_1w1a.5} parent=0 // loop_footer
    %s14 = sadd.s32 1, %s10
  $region7: #{basic_block_1w1a.5} parent=0 // loop_footer_branch
    %9 = sbr.rel target = $region3
  $region8: #{basic_block_1w1a.5} parent=0 // loop_exit
    _

// kernel: basic_block_1w1a.4
$region0: #{basic_block_1w1a.4}
  #allocation0 [shape = 'u32[]', space=smem, size = 0x4, offset = 0x4, fixed_abs, tag = 'smem constant byte address 0x4 - core index']
  #allocation1 [shape = 'u32[144,128]{1,0:T(1,128)}', space=vmem, size = 0x12000, scoped, tag = 'internal scratch']
  #allocation2 [shape = 'f32[1,18,18,8]{3,2,1,0:T(8,128)}', space=vmem, size = 0x36000, scoped, tag = 'scratch operand']
  %s0 = inlined_call_operand.vmem [shape: f32[2,16,16,8], index: 0, kind: input, shape index: {}]
  %s1 = inlined_call_operand.vmem [shape: bf16[72,8], index: 1, kind: input, shape index: {}]
  %s2 = inlined_call_operand.vmem [shape: bf16[2,16,16,8], index: 2, kind: output, shape index: {0}]
  %s3 = inlined_call_operand.vmem [shape: f32[1,8], index: 3, kind: output, shape index: {1}]
  %s4 = inlined_call_operand.vmem [shape: f32[1,8], index: 4, kind: output, shape index: {2}]
  %5 = xla_tuple %s2, %s3, %s4
  %s6 = sld [smem:[#allocation0]]
  $region61: #{basic_block_1w1a.4} parent=0
    _
  %s8 = ssub.s32 1, %s6
  %s9 = scalar_select 0, %s8, %s6
  loop: start=0, step=1, limit=4
  $region2: #{basic_block_1w1a.4} parent=0 // loop_pre_header
    _
  $region3: #{basic_block_1w1a.4} parent=0 // loop_header
    %s11 = sphi 0, %s15
    %p12 = scmp.ge.s32.totalorder %s11, 4
    %s21 = sphi 0, %s23
    %s24 = sphi 0, %s21
    %s25 = sphi 0, %s24
    %s41 = sphi 0, %s25
    %s45 = sphi 0, %s45
    %s47 = sphi 0, %s45
    %s48 = sphi 0, %s47
    %s62 = sphi 0, %s48
    %s68 = sphi 0, %s70
    %s71 = sphi 0, %s68
    %s72 = sphi 0, %s71
    %s88 = sphi 0, %s72
    %s92 = sphi 0, %s92
    %s94 = sphi 0, %s92
    %s95 = sphi 0, %s94
    %s109 = sphi 0, %s95
    %s113 = sphi 0, %s113
    %s115 = sphi 0, %s113
    %s116 = sphi 0, %s115
    %s130 = sphi 0, %s116
  $region4: #{basic_block_1w1a.4} parent=0 // loop_header_branch
    %14 = sbr.rel (%p12) target = $region8
  $region5: #{basic_block_1w1a.4} parent=0 // loop_body
    %s16 = ssub.s32 %s11, 1
    %s17 = ssub.s32 %s11, 2
    %s18 = sadd.s32 %s11, 1
    %s19 = ssub.s32 %s11, %s18
    %p20 = scmp.eq.s32.totalorder %s19, 0
    %s22 = sadd.s32 %s21, 1
    %s23 = scalar_select %p20, %s21, %s22
    %p26 = pneg %p20
    %p27 = scmp.eq.s32.totalorder %s11, 1
    %p28 = por %p26, %p27
    %p29 = scmp.ne.s32.totalorder %s21, %s24
    %p30 = scmp.eq.s32.totalorder %s11, 0
    %p31 = por %p29, %p30
    %p32 = scmp.ne.s32.totalorder %s21, %s24
    %p33 = scmp.eq.s32.totalorder %s16, 1
    %p34 = por %p32, %p33
    %p35 = scmp.ne.s32.totalorder %s24, %s25
    %p36 = scmp.eq.s32.totalorder %s16, 0
    %p37 = por %p35, %p36
    %p38 = scmp.ne.s32.totalorder %s24, %s25
    %p39 = scmp.eq.s32.totalorder %s17, 1
    %p40 = por %p38, %p39
    %p42 = scmp.ne.s32.totalorder %s25, %s41
    %p43 = scmp.eq.s32.totalorder %s17, 0
    %p44 = por %p42, %p43
    %s46 = sadd.s32 %s45, 1
    %p49 = scmp.eq.s32.totalorder %s11, 1
    %p50 = scmp.ne.s32.totalorder %s45, %s47
    %p51 = scmp.eq.s32.totalorder %s11, 0
    %p52 = por %p50, %p51
    %p53 = scmp.ne.s32.totalorder %s45, %s47
    %p54 = scmp.eq.s32.totalorder %s16, 1
    %p55 = por %p53, %p54
    %p56 = scmp.ne.s32.totalorder %s47, %s48
    %p57 = scmp.eq.s32.totalorder %s16, 0
    %p58 = por %p56, %p57
    %p59 = scmp.ne.s32.totalorder %s47, %s48
    %p60 = scmp.eq.s32.totalorder %s17, 1
    %p61 = por %p59, %p60
    %p63 = scmp.ne.s32.totalorder %s48, %s62
    %p64 = scmp.eq.s32.totalorder %s17, 0
    %p65 = por %p63, %p64
    %s66 = ssub.s32 %s11, %s18
    %p67 = scmp.eq.s32.totalorder %s66, 0
    %s69 = sadd.s32 %s68, 1
    %s70 = scalar_select %p67, %s68, %s69
    %p73 = pneg %p67
    %p74 = scmp.eq.s32.totalorder %s11, 1
    %p75 = por %p73, %p74
    %p76 = scmp.ne.s32.totalorder %s68, %s71
    %p77 = scmp.eq.s32.totalorder %s11, 0
    %p78 = por %p76, %p77
    %p79 = scmp.ne.s32.totalorder %s68, %s71
    %p80 = scmp.eq.s32.totalorder %s16, 1
    %p81 = por %p79, %p80
    %p82 = scmp.ne.s32.totalorder %s71, %s72
    %p83 = scmp.eq.s32.totalorder %s16, 0
    %p84 = por %p82, %p83
    %p85 = scmp.ne.s32.totalorder %s71, %s72
    %p86 = scmp.eq.s32.totalorder %s17, 1
    %p87 = por %p85, %p86
    %p89 = scmp.ne.s32.totalorder %s72, %s88
    %p90 = scmp.eq.s32.totalorder %s17, 0
    %p91 = por %p89, %p90
    %s93 = sadd.s32 %s92, 1
    %p96 = scmp.eq.s32.totalorder %s11, 1
    %p97 = scmp.ne.s32.totalorder %s92, %s94
    %p98 = scmp.eq.s32.totalorder %s11, 0
    %p99 = por %p97, %p98
    %p100 = scmp.ne.s32.totalorder %s92, %s94
    %p101 = scmp.eq.s32.totalorder %s16, 1
    %p102 = por %p100, %p101
    %p103 = scmp.ne.s32.totalorder %s94, %s95
    %p104 = scmp.eq.s32.totalorder %s16, 0
    %p105 = por %p103, %p104
    %p106 = scmp.ne.s32.totalorder %s94, %s95
    %p107 = scmp.eq.s32.totalorder %s17, 1
    %p108 = por %p106, %p107
    %p110 = scmp.ne.s32.totalorder %s95, %s109
    %p111 = scmp.eq.s32.totalorder %s17, 0
    %p112 = por %p110, %p111
    %s114 = sadd.s32 %s113, 1
    %p117 = scmp.eq.s32.totalorder %s11, 1
    %p118 = scmp.ne.s32.totalorder %s113, %s115
    %p119 = scmp.eq.s32.totalorder %s11, 0
    %p120 = por %p118, %p119
    %p121 = scmp.ne.s32.totalorder %s113, %s115
    %p122 = scmp.eq.s32.totalorder %s16, 1
    %p123 = por %p121, %p122
    %p124 = scmp.ne.s32.totalorder %s115, %s116
    %p125 = scmp.eq.s32.totalorder %s16, 0
    %p126 = por %p124, %p125
    %p127 = scmp.ne.s32.totalorder %s115, %s116
    %p128 = scmp.eq.s32.totalorder %s17, 1
    %p129 = por %p127, %p128
    %p131 = scmp.ne.s32.totalorder %s116, %s130
    %p132 = scmp.eq.s32.totalorder %s17, 0
    %p133 = por %p131, %p132
    %p134 = scmp.le.s32.totalorder 1, %s11
    %p135 = scmp.lt.s32.totalorder %s11, 3
    %p136 = pnand %p134, %p135
    %p137 = pneg %p136
    // Predicated region
    $region9: #{basic_block_1w1a.4} parent=5 // pred_check
      _
    $region10: #{basic_block_1w1a.4} parent=5 // pred_check_branch
      %139 = sbr.rel (%p136) target = $region12
    $region11: #{basic_block_1w1a.4} parent=5 // pred_region
      %s140 = ssub.s32 %s11, 1
      // Predicated region
      $region13: #{basic_block_1w1a.4} parent=11 // pred_check
        %p141 = pneg %p58
      $region14: #{basic_block_1w1a.4} parent=11 // pred_check_branch
        %143 = sbr.rel (%p141) target = $region16
      $region15: #{basic_block_1w1a.4} parent=11 // pred_region
        _
      $region16: #{basic_block_1w1a.4} parent=11 // pred_fallthru
        _
    $region12: #{basic_block_1w1a.4} parent=5 // pred_fallthru
      _
    %p144 = scmp.lt.s32.totalorder %s11, 2
    // Predicated region
    $region17: #{basic_block_1w1a.4} parent=5 // pred_check
      %p145 = pneg %p144
    $region18: #{basic_block_1w1a.4} parent=5 // pred_check_branch
      %147 = sbr.rel (%p145) target = $region20
    $region19: #{basic_block_1w1a.4} parent=5 // pred_region
      // Predicated region
      $region21: #{basic_block_1w1a.4} parent=19 // pred_check
        %p148 = pneg %p31
      $region22: #{basic_block_1w1a.4} parent=19 // pred_check_branch
        %150 = sbr.rel (%p148) target = $region24
      $region23: #{basic_block_1w1a.4} parent=19 // pred_region
        %p151 = scmp.lt.s32.totalorder %s11, 1
        %s152 = scalar_select %p151, %s11, 1
        %s153 = smul.addr %s152, 32
        %s154 = smul.addr %s153, 8
        %s155 = scalar_lea.vmem %s0, %s154
      $region24: #{basic_block_1w1a.4} parent=19 // pred_fallthru
        _
    $region20: #{basic_block_1w1a.4} parent=5 // pred_fallthru
      _
    %p156 = scmp.le.s32.totalorder 1, %s11
    %p157 = scmp.lt.s32.totalorder %s11, 3
    %p158 = pnand %p156, %p157
    %p159 = pneg %p158
    // Predicated region
    $region25: #{basic_block_1w1a.4} parent=5 // pred_check
      _
    $region26: #{basic_block_1w1a.4} parent=5 // pred_check_branch
      %161 = sbr.rel (%p158) target = $region28
    $region27: #{basic_block_1w1a.4} parent=5 // pred_region
      %s162 = ssub.s32 %s11, 1
      %p163 = scmp.lt.s32.totalorder %s16, 1
      %s164 = scalar_select %p163, %s16, 1
      %s165 = smul.addr %s164, 32
      %s166 = smul.addr %s165, 8
      %s167 = scalar_lea.vmem %s0, %s166
      %p168 = pneg %p37
      %p169 = pneg %p34
      %p170 = pneg %p58
      %p171 = pneg %p55
      %p172 = pneg %p84
      %p173 = pneg %p81
      %p174 = scmp.lt.s32.totalorder %s16, 1
      %s175 = scalar_select %p174, %s16, 1
      %s176 = smul.addr %s175, 32
      %s177 = smul.addr %s176, 4
      %s178 = scalar_lea.vmem %s2, %s177
      %p179 = pneg %p105
      %p180 = pneg %p102
      %p181 = pneg %p126
      %p182 = pneg %p123
      %p183 = scmp.lt.s32.totalorder %s16, 1
      %s184 = scalar_select %p183, %s16, 1
      %s185 = smul.addr %s184, 32
      %s186 = smul.addr %s185, 8
      %s187 = scalar_lea.vmem %s0, %s186
      %p188 = scmp.lt.s32.totalorder %s16, 1
      %s189 = scalar_select %p188, %s16, 1
      %s190 = smul.addr %s189, 32
      %s191 = smul.addr %s190, 4
      %s192 = scalar_lea.vmem %s2, %s191
      %p194 = scmp.eq.s32.totalorder %s16, 0
      // Predicated region
      $region29: #{basic_block_1w1a.4} parent=27 // pred_check
        %p195 = pneg %p194
      $region30: #{basic_block_1w1a.4} parent=27 // pred_check_branch
        %197 = sbr.rel (%p195) target = $region32
      $region31: #{basic_block_1w1a.4} parent=27 // pred_region
        %vm198 = vcmask 57344
        %199 = vst.msk [vmem:[%s3] sm:$0x1] %vm198, 0.0
        %200 = vst.msk [vmem:[%s4] sm:$0x1] %vm198, 0.0
        %vm201 = vcmask 64512
        %202 = vst.msk [vmem:[#allocation2] sm:$0xff] %vm201, 0.0
        %203 = vst.msk [vmem:[#allocation2 + $0x8] sm:$0xff] %vm201, 0.0
        %vm204 = vcmask 58368
        %205 = vst.msk [vmem:[#allocation2 + $0x10] sm:$0x3] %vm204, 0.0
        %206 = vst.msk [vmem:[#allocation2 + $0x18] sm:$0xff] %vm201, 0.0
        %207 = vst.msk [vmem:[#allocation2 + $0x20] sm:$0xff] %vm201, 0.0
        %208 = vst.msk [vmem:[#allocation2 + $0x28] sm:$0x3] %vm204, 0.0
        %209 = vst.msk [vmem:[#allocation2 + $0x30] sm:$0xff] %vm201, 0.0
        %210 = vst.msk [vmem:[#allocation2 + $0x38] sm:$0xff] %vm201, 0.0
        %211 = vst.msk [vmem:[#allocation2 + $0x40] sm:$0x3] %vm204, 0.0
        %212 = vst.msk [vmem:[#allocation2 + $0x48] sm:$0xff] %vm201, 0.0
        %213 = vst.msk [vmem:[#allocation2 + $0x50] sm:$0xff] %vm201, 0.0
        %214 = vst.msk [vmem:[#allocation2 + $0x58] sm:$0x3] %vm204, 0.0
        %215 = vst.msk [vmem:[#allocation2 + $0x60] sm:$0xff] %vm201, 0.0
        %216 = vst.msk [vmem:[#allocation2 + $0x68] sm:$0xff] %vm201, 0.0
        %217 = vst.msk [vmem:[#allocation2 + $0x70] sm:$0x3] %vm204, 0.0
        %218 = vst.msk [vmem:[#allocation2 + $0x78] sm:$0xff] %vm201, 0.0
        %219 = vst.msk [vmem:[#allocation2 + $0x80] sm:$0xff] %vm201, 0.0
        %220 = vst.msk [vmem:[#allocation2 + $0x88] sm:$0x3] %vm204, 0.0
        %221 = vst.msk [vmem:[#allocation2 + $0x90] sm:$0xff] %vm201, 0.0
        %222 = vst.msk [vmem:[#allocation2 + $0x98] sm:$0xff] %vm201, 0.0
        %223 = vst.msk [vmem:[#allocation2 + $0xa0] sm:$0x3] %vm204, 0.0
        %224 = vst.msk [vmem:[#allocation2 + $0xa8] sm:$0xff] %vm201, 0.0
        %225 = vst.msk [vmem:[#allocation2 + $0xb0] sm:$0xff] %vm201, 0.0
        %226 = vst.msk [vmem:[#allocation2 + $0xb8] sm:$0x3] %vm204, 0.0
        %227 = vst.msk [vmem:[#allocation2 + $0xc0] sm:$0xff] %vm201, 0.0
        %228 = vst.msk [vmem:[#allocation2 + $0xc8] sm:$0xff] %vm201, 0.0
        %229 = vst.msk [vmem:[#allocation2 + $0xd0] sm:$0x3] %vm204, 0.0
        %230 = vst.msk [vmem:[#allocation2 + $0xd8] sm:$0xff] %vm201, 0.0
        %231 = vst.msk [vmem:[#allocation2 + $0xe0] sm:$0xff] %vm201, 0.0
        %232 = vst.msk [vmem:[#allocation2 + $0xe8] sm:$0x3] %vm204, 0.0
        %233 = vst.msk [vmem:[#allocation2 + $0xf0] sm:$0xff] %vm201, 0.0
        %234 = vst.msk [vmem:[#allocation2 + $0xf8] sm:$0xff] %vm201, 0.0
        %235 = vst.msk [vmem:[#allocation2 + $0x100] sm:$0x3] %vm204, 0.0
        %236 = vst.msk [vmem:[#allocation2 + $0x108] sm:$0xff] %vm201, 0.0
        %237 = vst.msk [vmem:[#allocation2 + $0x110] sm:$0xff] %vm201, 0.0
        %238 = vst.msk [vmem:[#allocation2 + $0x118] sm:$0x3] %vm204, 0.0
        %239 = vst.msk [vmem:[#allocation2 + $0x120] sm:$0xff] %vm201, 0.0
        %240 = vst.msk [vmem:[#allocation2 + $0x128] sm:$0xff] %vm201, 0.0
        %241 = vst.msk [vmem:[#allocation2 + $0x130] sm:$0x3] %vm204, 0.0
        %242 = vst.msk [vmem:[#allocation2 + $0x138] sm:$0xff] %vm201, 0.0
        %243 = vst.msk [vmem:[#allocation2 + $0x140] sm:$0xff] %vm201, 0.0
        %244 = vst.msk [vmem:[#allocation2 + $0x148] sm:$0x3] %vm204, 0.0
        %245 = vst.msk [vmem:[#allocation2 + $0x150] sm:$0xff] %vm201, 0.0
        %246 = vst.msk [vmem:[#allocation2 + $0x158] sm:$0xff] %vm201, 0.0
        %247 = vst.msk [vmem:[#allocation2 + $0x160] sm:$0x3] %vm204, 0.0
        %248 = vst.msk [vmem:[#allocation2 + $0x168] sm:$0xff] %vm201, 0.0
        %249 = vst.msk [vmem:[#allocation2 + $0x170] sm:$0xff] %vm201, 0.0
        %250 = vst.msk [vmem:[#allocation2 + $0x178] sm:$0x3] %vm204, 0.0
        %251 = vst.msk [vmem:[#allocation2 + $0x180] sm:$0xff] %vm201, 0.0
        %252 = vst.msk [vmem:[#allocation2 + $0x188] sm:$0xff] %vm201, 0.0
        %253 = vst.msk [vmem:[#allocation2 + $0x190] sm:$0x3] %vm204, 0.0
        %254 = vst.msk [vmem:[#allocation2 + $0x198] sm:$0xff] %vm201, 0.0
        %255 = vst.msk [vmem:[#allocation2 + $0x1a0] sm:$0xff] %vm201, 0.0
        %256 = vst.msk [vmem:[#allocation2 + $0x1a8] sm:$0x3] %vm204, 0.0
      $region32: #{basic_block_1w1a.4} parent=27 // pred_fallthru
        _
      %v257 = vld [vmem:[%s187] sm:$0xff]
      %v258 = vld [vmem:[%s187 + $0x8] sm:$0xff]
      %v259 = vld [vmem:[%s187 + $0x10] sm:$0xff]
      %v260 = vld [vmem:[%s187 + $0x18] sm:$0xff]
      %v261 = vld [vmem:[%s187 + $0x20] sm:$0xff]
      %v262 = vld [vmem:[%s187 + $0x28] sm:$0xff]
      %v263 = vld [vmem:[%s187 + $0x30] sm:$0xff]
      %v264 = vld [vmem:[%s187 + $0x38] sm:$0xff]
      %v265 = vld [vmem:[%s187 + $0x40] sm:$0xff]
      %v266 = vld [vmem:[%s187 + $0x48] sm:$0xff]
      %v267 = vld [vmem:[%s187 + $0x50] sm:$0xff]
      %v268 = vld [vmem:[%s187 + $0x58] sm:$0xff]
      %v269 = vld [vmem:[%s187 + $0x60] sm:$0xff]
      %v270 = vld [vmem:[%s187 + $0x68] sm:$0xff]
      %v271 = vld [vmem:[%s187 + $0x70] sm:$0xff]
      %v272 = vld [vmem:[%s187 + $0x78] sm:$0xff]
      %v273 = vld [vmem:[%s187 + $0x80] sm:$0xff]
      %v274 = vld [vmem:[%s187 + $0x88] sm:$0xff]
      %v275 = vld [vmem:[%s187 + $0x90] sm:$0xff]
      %v276 = vld [vmem:[%s187 + $0x98] sm:$0xff]
      %v277 = vld [vmem:[%s187 + $0xa0] sm:$0xff]
      %v278 = vld [vmem:[%s187 + $0xa8] sm:$0xff]
      %v279 = vld [vmem:[%s187 + $0xb0] sm:$0xff]
      %v280 = vld [vmem:[%s187 + $0xb8] sm:$0xff]
      %v281 = vld [vmem:[%s187 + $0xc0] sm:$0xff]
      %v282 = vld [vmem:[%s187 + $0xc8] sm:$0xff]
      %v283 = vld [vmem:[%s187 + $0xd0] sm:$0xff]
      %v284 = vld [vmem:[%s187 + $0xd8] sm:$0xff]
      %v285 = vld [vmem:[%s187 + $0xe0] sm:$0xff]
      %v286 = vld [vmem:[%s187 + $0xe8] sm:$0xff]
      %v287 = vld [vmem:[%s187 + $0xf0] sm:$0xff]
      %v288 = vld [vmem:[%s187 + $0xf8] sm:$0xff]
      %vm289 = vcmp.gt.f32.partialorder %v257, 0.0
      %vm290 = vcmp.gt.f32.partialorder %v258, 0.0
      %vm291 = vcmp.gt.f32.partialorder %v259, 0.0
      %vm292 = vcmp.gt.f32.partialorder %v260, 0.0
      %vm293 = vcmp.gt.f32.partialorder %v261, 0.0
      %vm294 = vcmp.gt.f32.partialorder %v262, 0.0
      %vm295 = vcmp.gt.f32.partialorder %v263, 0.0
      %vm296 = vcmp.gt.f32.partialorder %v264, 0.0
      %vm297 = vcmp.gt.f32.partialorder %v265, 0.0
      %vm298 = vcmp.gt.f32.partialorder %v266, 0.0
      %vm299 = vcmp.gt.f32.partialorder %v267, 0.0
      %vm300 = vcmp.gt.f32.partialorder %v268, 0.0
      %vm301 = vcmp.gt.f32.partialorder %v269, 0.0
      %vm302 = vcmp.gt.f32.partialorder %v270, 0.0
      %vm303 = vcmp.gt.f32.partialorder %v271, 0.0
      %vm304 = vcmp.gt.f32.partialorder %v272, 0.0
      %vm305 = vcmp.gt.f32.partialorder %v273, 0.0
      %vm306 = vcmp.gt.f32.partialorder %v274, 0.0
      %vm307 = vcmp.gt.f32.partialorder %v275, 0.0
      %vm308 = vcmp.gt.f32.partialorder %v276, 0.0
      %vm309 = vcmp.gt.f32.partialorder %v277, 0.0
      %vm310 = vcmp.gt.f32.partialorder %v278, 0.0
      %vm311 = vcmp.gt.f32.partialorder %v279, 0.0
      %vm312 = vcmp.gt.f32.partialorder %v280, 0.0
      %vm313 = vcmp.gt.f32.partialorder %v281, 0.0
      %vm314 = vcmp.gt.f32.partialorder %v282, 0.0
      %vm315 = vcmp.gt.f32.partialorder %v283, 0.0
      %vm316 = vcmp.gt.f32.partialorder %v284, 0.0
      %vm317 = vcmp.gt.f32.partialorder %v285, 0.0
      %vm318 = vcmp.gt.f32.partialorder %v286, 0.0
      %vm319 = vcmp.gt.f32.partialorder %v287, 0.0
      %vm320 = vcmp.gt.f32.partialorder %v288, 0.0
      %vm321 = vcmp.lt.f32.partialorder %v257, 0.0
      %vm322 = vcmp.lt.f32.partialorder %v258, 0.0
      %vm323 = vcmp.lt.f32.partialorder %v259, 0.0
      %vm324 = vcmp.lt.f32.partialorder %v260, 0.0
      %vm325 = vcmp.lt.f32.partialorder %v261, 0.0
      %vm326 = vcmp.lt.f32.partialorder %v262, 0.0
      %vm327 = vcmp.lt.f32.partialorder %v263, 0.0
      %vm328 = vcmp.lt.f32.partialorder %v264, 0.0
      %vm329 = vcmp.lt.f32.partialorder %v265, 0.0
      %vm330 = vcmp.lt.f32.partialorder %v266, 0.0
      %vm331 = vcmp.lt.f32.partialorder %v267, 0.0
      %vm332 = vcmp.lt.f32.partialorder %v268, 0.0
      %vm333 = vcmp.lt.f32.partialorder %v269, 0.0
      %vm334 = vcmp.lt.f32.partialorder %v270, 0.0
      %vm335 = vcmp.lt.f32.partialorder %v271, 0.0
      %vm336 = vcmp.lt.f32.partialorder %v272, 0.0
      %vm337 = vcmp.lt.f32.partialorder %v273, 0.0
      %vm338 = vcmp.lt.f32.partialorder %v274, 0.0
      %vm339 = vcmp.lt.f32.partialorder %v275, 0.0
      %vm340 = vcmp.lt.f32.partialorder %v276, 0.0
      %vm341 = vcmp.lt.f32.partialorder %v277, 0.0
      %vm342 = vcmp.lt.f32.partialorder %v278, 0.0
      %vm343 = vcmp.lt.f32.partialorder %v279, 0.0
      %vm344 = vcmp.lt.f32.partialorder %v280, 0.0
      %vm345 = vcmp.lt.f32.partialorder %v281, 0.0
      %vm346 = vcmp.lt.f32.partialorder %v282, 0.0
      %vm347 = vcmp.lt.f32.partialorder %v283, 0.0
      %vm348 = vcmp.lt.f32.partialorder %v284, 0.0
      %vm349 = vcmp.lt.f32.partialorder %v285, 0.0
      %vm350 = vcmp.lt.f32.partialorder %v286, 0.0
      %vm351 = vcmp.lt.f32.partialorder %v287, 0.0
      %vm352 = vcmp.lt.f32.partialorder %v288, 0.0
      %v353 = vsel %vm321, -1.0, 0.0
      %v354 = vsel %vm322, -1.0, 0.0
      %v355 = vsel %vm323, -1.0, 0.0
      %v356 = vsel %vm324, -1.0, 0.0
      %v357 = vsel %vm325, -1.0, 0.0
      %v358 = vsel %vm326, -1.0, 0.0
      %v359 = vsel %vm327, -1.0, 0.0
      %v360 = vsel %vm328, -1.0, 0.0
      %v361 = vsel %vm329, -1.0, 0.0
      %v362 = vsel %vm330, -1.0, 0.0
      %v363 = vsel %vm331, -1.0, 0.0
      %v364 = vsel %vm332, -1.0, 0.0
      %v365 = vsel %vm333, -1.0, 0.0
      %v366 = vsel %vm334, -1.0, 0.0
      %v367 = vsel %vm335, -1.0, 0.0
      %v368 = vsel %vm336, -1.0, 0.0
      %v369 = vsel %vm337, -1.0, 0.0
      %v370 = vsel %vm338, -1.0, 0.0
      %v371 = vsel %vm339, -1.0, 0.0
      %v372 = vsel %vm340, -1.0, 0.0
      %v373 = vsel %vm341, -1.0, 0.0
      %v374 = vsel %vm342, -1.0, 0.0
      %v375 = vsel %vm343, -1.0, 0.0
      %v376 = vsel %vm344, -1.0, 0.0
      %v377 = vsel %vm345, -1.0, 0.0
      %v378 = vsel %vm346, -1.0, 0.0
      %v379 = vsel %vm347, -1.0, 0.0
      %v380 = vsel %vm348, -1.0, 0.0
      %v381 = vsel %vm349, -1.0, 0.0
      %v382 = vsel %vm350, -1.0, 0.0
      %v383 = vsel %vm351, -1.0, 0.0
      %v384 = vsel %vm352, -1.0, 0.0
      %v385 = vsel %vm289, 1.0, %v353
      %v386 = vsel %vm290, 1.0, %v354
      %v387 = vsel %vm291, 1.0, %v355
      %v388 = vsel %vm292, 1.0, %v356
      %v389 = vsel %vm293, 1.0, %v357
      %v390 = vsel %vm294, 1.0, %v358
      %v391 = vsel %vm295, 1.0, %v359
      %v392 = vsel %vm296, 1.0, %v360
      %v393 = vsel %vm297, 1.0, %v361
      %v394 = vsel %vm298, 1.0, %v362
      %v395 = vsel %vm299, 1.0, %v363
      %v396 = vsel %vm300, 1.0, %v364
      %v397 = vsel %vm301, 1.0, %v365
      %v398 = vsel %vm302, 1.0, %v366
      %v399 = vsel %vm303, 1.0, %v367
      %v400 = vsel %vm304, 1.0, %v368
      %v401 = vsel %vm305, 1.0, %v369
      %v402 = vsel %vm306, 1.0, %v370
      %v403 = vsel %vm307, 1.0, %v371
      %v404 = vsel %vm308, 1.0, %v372
      %v405 = vsel %vm309, 1.0, %v373
      %v406 = vsel %vm310, 1.0, %v374
      %v407 = vsel %vm311, 1.0, %v375
      %v408 = vsel %vm312, 1.0, %v376
      %v409 = vsel %vm313, 1.0, %v377
      %v410 = vsel %vm314, 1.0, %v378
      %v411 = vsel %vm315, 1.0, %v379
      %v412 = vsel %vm316, 1.0, %v380
      %v413 = vsel %vm317, 1.0, %v381
      %v414 = vsel %vm318, 1.0, %v382
      %v415 = vsel %vm319, 1.0, %v383
      %v416 = vsel %vm320, 1.0, %v384
      %s417 = scalar_lea.vmem [#allocation2], 24
      %vm418 = vcmask 64512
      %419 = vst.msk [vmem:[%s417 + $0x1] sm:$0xff] %vm418, %v385
      %420 = vst.msk [vmem:[%s417 + $0x9] sm:$0xff] %vm418, %v386
      %421 = vst.msk [vmem:[%s417 + $0x19] sm:$0xff] %vm418, %v387
      %422 = vst.msk [vmem:[%s417 + $0x21] sm:$0xff] %vm418, %v388
      %423 = vst.msk [vmem:[%s417 + $0x31] sm:$0xff] %vm418, %v389
      %424 = vst.msk [vmem:[%s417 + $0x39] sm:$0xff] %vm418, %v390
      %425 = vst.msk [vmem:[%s417 + $0x49] sm:$0xff] %vm418, %v391
      %426 = vst.msk [vmem:[%s417 + $0x51] sm:$0xff] %vm418, %v392
      %427 = vst.msk [vmem:[%s417 + $0x61] sm:$0xff] %vm418, %v393
      %428 = vst.msk [vmem:[%s417 + $0x69] sm:$0xff] %vm418, %v394
      %429 = vst.msk [vmem:[%s417 + $0x79] sm:$0xff] %vm418, %v395
      %430 = vst.msk [vmem:[%s417 + $0x81] sm:$0xff] %vm418, %v396
      %431 = vst.msk [vmem:[%s417 + $0x91] sm:$0xff] %vm418, %v397
      %432 = vst.msk [vmem:[%s417 + $0x99] sm:$0xff] %vm418, %v398
      %433 = vst.msk [vmem:[%s417 + $0xa9] sm:$0xff] %vm418, %v399
      %434 = vst.msk [vmem:[%s417 + $0xb1] sm:$0xff] %vm418, %v400
      %435 = vst.msk [vmem:[%s417 + $0xc1] sm:$0xff] %vm418, %v401
      %436 = vst.msk [vmem:[%s417 + $0xc9] sm:$0xff] %vm418, %v402
      %437 = vst.msk [vmem:[%s417 + $0xd9] sm:$0xff] %vm418, %v403
      %438 = vst.msk [vmem:[%s417 + $0xe1] sm:$0xff] %vm418, %v404
      %439 = vst.msk [vmem:[%s417 + $0xf1] sm:$0xff] %vm418, %v405
      %440 = vst.msk [vmem:[%s417 + $0xf9] sm:$0xff] %vm418, %v406
      %441 = vst.msk [vmem:[%s417 + $0x109] sm:$0xff] %vm418, %v407
      %442 = vst.msk [vmem:[%s417 + $0x111] sm:$0xff] %vm418, %v408
      %443 = vst.msk [vmem:[%s417 + $0x121] sm:$0xff] %vm418, %v409
      %444 = vst.msk [vmem:[%s417 + $0x129] sm:$0xff] %vm418, %v410
      %445 = vst.msk [vmem:[%s417 + $0x139] sm:$0xff] %vm418, %v411
      %446 = vst.msk [vmem:[%s417 + $0x141] sm:$0xff] %vm418, %v412
      %447 = vst.msk [vmem:[%s417 + $0x151] sm:$0xff] %vm418, %v413
      %448 = vst.msk [vmem:[%s417 + $0x159] sm:$0xff] %vm418, %v414
      %449 = vst.msk [vmem:[%s417 + $0x169] sm:$0xff] %vm418, %v415
      %450 = vst.msk [vmem:[%s417 + $0x171] sm:$0xff] %vm418, %v416
      %v451 = vld [vmem:[#allocation2] sm:$0xff]
      %v452 = vld [vmem:[#allocation2 + $0x8] sm:$0xff]
      %v453 = vld [vmem:[#allocation2 + $0x18] sm:$0xff]
      %v454 = vld [vmem:[#allocation2 + $0x20] sm:$0xff]
      %v455 = vld [vmem:[#allocation2 + $0x30] sm:$0xff]
      %v456 = vld [vmem:[#allocation2 + $0x38] sm:$0xff]
      %v457 = vld [vmem:[#allocation2 + $0x48] sm:$0xff]
      %v458 = vld [vmem:[#allocation2 + $0x50] sm:$0xff]
      %v459 = vld [vmem:[#allocation2 + $0x60] sm:$0xff]
      %v460 = vld [vmem:[#allocation2 + $0x68] sm:$0xff]
      %v461 = vld [vmem:[#allocation2 + $0x78] sm:$0xff]
      %v462 = vld [vmem:[#allocation2 + $0x80] sm:$0xff]
      %v463 = vld [vmem:[#allocation2 + $0x90] sm:$0xff]
      %v464 = vld [vmem:[#allocation2 + $0x98] sm:$0xff]
      %v465 = vld [vmem:[#allocation2 + $0xa8] sm:$0xff]
      %v466 = vld [vmem:[#allocation2 + $0xb0] sm:$0xff]
      %v467 = vld [vmem:[#allocation2 + $0xc0] sm:$0xff]
      %v468 = vld [vmem:[#allocation2 + $0xc8] sm:$0xff]
      %v469 = vld [vmem:[#allocation2 + $0xd8] sm:$0xff]
      %v470 = vld [vmem:[#allocation2 + $0xe0] sm:$0xff]
      %v471 = vld [vmem:[#allocation2 + $0xf0] sm:$0xff]
      %v472 = vld [vmem:[#allocation2 + $0xf8] sm:$0xff]
      %v473 = vld [vmem:[#allocation2 + $0x108] sm:$0xff]
      %v474 = vld [vmem:[#allocation2 + $0x110] sm:$0xff]
      %v475 = vld [vmem:[#allocation2 + $0x120] sm:$0xff]
      %v476 = vld [vmem:[#allocation2 + $0x128] sm:$0xff]
      %v477 = vld [vmem:[#allocation2 + $0x138] sm:$0xff]
      %v478 = vld [vmem:[#allocation2 + $0x140] sm:$0xff]
      %v479 = vld [vmem:[#allocation2 + $0x150] sm:$0xff]
      %v480 = vld [vmem:[#allocation2 + $0x158] sm:$0xff]
      %v481 = vld [vmem:[#allocation2 + $0x168] sm:$0xff]
      %v482 = vld [vmem:[#allocation2 + $0x170] sm:$0xff]
      %v483 = vld [vmem:[#allocation2 + $0x1] sm:$0xff]
      %v484 = vld [vmem:[#allocation2 + $0x9] sm:$0xff]
      %v485 = vld [vmem:[#allocation2 + $0x19] sm:$0xff]
      %v486 = vld [vmem:[#allocation2 + $0x21] sm:$0xff]
      %v487 = vld [vmem:[#allocation2 + $0x31] sm:$0xff]
      %v488 = vld [vmem:[#allocation2 + $0x39] sm:$0xff]
      %v489 = vld [vmem:[#allocation2 + $0x49] sm:$0xff]
      %v490 = vld [vmem:[#allocation2 + $0x51] sm:$0xff]
      %v491 = vld [vmem:[#allocation2 + $0x61] sm:$0xff]
      %v492 = vld [vmem:[#allocation2 + $0x69] sm:$0xff]
      %v493 = vld [vmem:[#allocation2 + $0x79] sm:$0xff]
      %v494 = vld [vmem:[#allocation2 + $0x81] sm:$0xff]
      %v495 = vld [vmem:[#allocation2 + $0x91] sm:$0xff]
      %v496 = vld [vmem:[#allocation2 + $0x99] sm:$0xff]
      %v497 = vld [vmem:[#allocation2 + $0xa9] sm:$0xff]
      %v498 = vld [vmem:[#allocation2 + $0xb1] sm:$0xff]
      %v499 = vld [vmem:[#allocation2 + $0xc1] sm:$0xff]
      %v500 = vld [vmem:[#allocation2 + $0xc9] sm:$0xff]
      %v501 = vld [vmem:[#allocation2 + $0xd9] sm:$0xff]
      %v502 = vld [vmem:[#allocation2 + $0xe1] sm:$0xff]
      %v503 = vld [vmem:[#allocation2 + $0xf1] sm:$0xff]
      %v504 = vld [vmem:[#allocation2 + $0xf9] sm:$0xff]
      %v505 = vld [vmem:[#allocation2 + $0x109] sm:$0xff]
      %v506 = vld [vmem:[#allocation2 + $0x111] sm:$0xff]
      %v507 = vld [vmem:[#allocation2 + $0x121] sm:$0xff]
      %v508 = vld [vmem:[#allocation2 + $0x129] sm:$0xff]
      %v509 = vld [vmem:[#allocation2 + $0x139] sm:$0xff]
      %v510 = vld [vmem:[#allocation2 + $0x141] sm:$0xff]
      %v511 = vld [vmem:[#allocation2 + $0x151] sm:$0xff]
      %v512 = vld [vmem:[#allocation2 + $0x159] sm:$0xff]
      %v513 = vld [vmem:[#allocation2 + $0x169] sm:$0xff]
      %v514 = vld [vmem:[#allocation2 + $0x171] sm:$0xff]
      %v515 = vld [vmem:[#allocation2 + $0x2] sm:$0xff]
      %v516 = vld [vmem:[#allocation2 + $0xa] sm:$0xff]
      %v517 = vld [vmem:[#allocation2 + $0x1a] sm:$0xff]
      %v518 = vld [vmem:[#allocation2 + $0x22] sm:$0xff]
      %v519 = vld [vmem:[#allocation2 + $0x32] sm:$0xff]
      %v520 = vld [vmem:[#allocation2 + $0x3a] sm:$0xff]
      %v521 = vld [vmem:[#allocation2 + $0x4a] sm:$0xff]
      %v522 = vld [vmem:[#allocation2 + $0x52] sm:$0xff]
      %v523 = vld [vmem:[#allocation2 + $0x62] sm:$0xff]
      %v524 = vld [vmem:[#allocation2 + $0x6a] sm:$0xff]
      %v525 = vld [vmem:[#allocation2 + $0x7a] sm:$0xff]
      %v526 = vld [vmem:[#allocation2 + $0x82] sm:$0xff]
      %v527 = vld [vmem:[#allocation2 + $0x92] sm:$0xff]
      %v528 = vld [vmem:[#allocation2 + $0x9a] sm:$0xff]
      %v529 = vld [vmem:[#allocation2 + $0xaa] sm:$0xff]
      %v530 = vld [vmem:[#allocation2 + $0xb2] sm:$0xff]
      %v531 = vld [vmem:[#allocation2 + $0xc2] sm:$0xff]
      %v532 = vld [vmem:[#allocation2 + $0xca] sm:$0xff]
      %v533 = vld [vmem:[#allocation2 + $0xda] sm:$0xff]
      %v534 = vld [vmem:[#allocation2 + $0xe2] sm:$0xff]
      %v535 = vld [vmem:[#allocation2 + $0xf2] sm:$0xff]
      %v536 = vld [vmem:[#allocation2 + $0xfa] sm:$0xff]
      %v537 = vld [vmem:[#allocation2 + $0x10a] sm:$0xff]
      %v538 = vld [vmem:[#allocation2 + $0x112] sm:$0xff]
      %v539 = vld [vmem:[#allocation2 + $0x122] sm:$0xff]
      %v540 = vld [vmem:[#allocation2 + $0x12a] sm:$0xff]
      %v541 = vld [vmem:[#allocation2 + $0x13a] sm:$0xff]
      %v542 = vld [vmem:[#allocation2 + $0x142] sm:$0xff]
      %v543 = vld [vmem:[#allocation2 + $0x152] sm:$0xff]
      %v544 = vld [vmem:[#allocation2 + $0x15a] sm:$0xff]
      %v545 = vld [vmem:[#allocation2 + $0x16a] sm:$0xff]
      %v546 = vld [vmem:[#allocation2 + $0x172] sm:$0xff]
      %v547 = vld [vmem:[%s417] sm:$0xff]
      %v548 = vld [vmem:[%s417 + $0x8] sm:$0xff]
      %v549 = vld [vmem:[%s417 + $0x18] sm:$0xff]
      %v550 = vld [vmem:[%s417 + $0x20] sm:$0xff]
      %v551 = vld [vmem:[%s417 + $0x30] sm:$0xff]
      %v552 = vld [vmem:[%s417 + $0x38] sm:$0xff]
      %v553 = vld [vmem:[%s417 + $0x48] sm:$0xff]
      %v554 = vld [vmem:[%s417 + $0x50] sm:$0xff]
      %v555 = vld [vmem:[%s417 + $0x60] sm:$0xff]
      %v556 = vld [vmem:[%s417 + $0x68] sm:$0xff]
      %v557 = vld [vmem:[%s417 + $0x78] sm:$0xff]
      %v558 = vld [vmem:[%s417 + $0x80] sm:$0xff]
      %v559 = vld [vmem:[%s417 + $0x90] sm:$0xff]
      %v560 = vld [vmem:[%s417 + $0x98] sm:$0xff]
      %v561 = vld [vmem:[%s417 + $0xa8] sm:$0xff]
      %v562 = vld [vmem:[%s417 + $0xb0] sm:$0xff]
      %v563 = vld [vmem:[%s417 + $0xc0] sm:$0xff]
      %v564 = vld [vmem:[%s417 + $0xc8] sm:$0xff]
      %v565 = vld [vmem:[%s417 + $0xd8] sm:$0xff]
      %v566 = vld [vmem:[%s417 + $0xe0] sm:$0xff]
      %v567 = vld [vmem:[%s417 + $0xf0] sm:$0xff]
      %v568 = vld [vmem:[%s417 + $0xf8] sm:$0xff]
      %v569 = vld [vmem:[%s417 + $0x108] sm:$0xff]
      %v570 = vld [vmem:[%s417 + $0x110] sm:$0xff]
      %v571 = vld [vmem:[%s417 + $0x120] sm:$0xff]
      %v572 = vld [vmem:[%s417 + $0x128] sm:$0xff]
      %v573 = vld [vmem:[%s417 + $0x138] sm:$0xff]
      %v574 = vld [vmem:[%s417 + $0x140] sm:$0xff]
      %v575 = vld [vmem:[%s417 + $0x150] sm:$0xff]
      %v576 = vld [vmem:[%s417 + $0x158] sm:$0xff]
      %v577 = vld [vmem:[%s417 + $0x168] sm:$0xff]
      %v578 = vld [vmem:[%s417 + $0x170] sm:$0xff]
      %v579 = vld [vmem:[%s417 + $0x1] sm:$0xff]
      %v580 = vld [vmem:[%s417 + $0x9] sm:$0xff]
      %v581 = vld [vmem:[%s417 + $0x19] sm:$0xff]
      %v582 = vld [vmem:[%s417 + $0x21] sm:$0xff]
      %v583 = vld [vmem:[%s417 + $0x31] sm:$0xff]
      %v584 = vld [vmem:[%s417 + $0x39] sm:$0xff]
      %v585 = vld [vmem:[%s417 + $0x49] sm:$0xff]
      %v586 = vld [vmem:[%s417 + $0x51] sm:$0xff]
      %v587 = vld [vmem:[%s417 + $0x61] sm:$0xff]
      %v588 = vld [vmem:[%s417 + $0x69] sm:$0xff]
      %v589 = vld [vmem:[%s417 + $0x79] sm:$0xff]
      %v590 = vld [vmem:[%s417 + $0x81] sm:$0xff]
      %v591 = vld [vmem:[%s417 + $0x91] sm:$0xff]
      %v592 = vld [vmem:[%s417 + $0x99] sm:$0xff]
      %v593 = vld [vmem:[%s417 + $0xa9] sm:$0xff]
      %v594 = vld [vmem:[%s417 + $0xb1] sm:$0xff]
      %v595 = vld [vmem:[%s417 + $0xc1] sm:$0xff]
      %v596 = vld [vmem:[%s417 + $0xc9] sm:$0xff]
      %v597 = vld [vmem:[%s417 + $0xd9] sm:$0xff]
      %v598 = vld [vmem:[%s417 + $0xe1] sm:$0xff]
      %v599 = vld [vmem:[%s417 + $0xf1] sm:$0xff]
      %v600 = vld [vmem:[%s417 + $0xf9] sm:$0xff]
      %v601 = vld [vmem:[%s417 + $0x109] sm:$0xff]
      %v602 = vld [vmem:[%s417 + $0x111] sm:$0xff]
      %v603 = vld [vmem:[%s417 + $0x121] sm:$0xff]
      %v604 = vld [vmem:[%s417 + $0x129] sm:$0xff]
      %v605 = vld [vmem:[%s417 + $0x139] sm:$0xff]
      %v606 = vld [vmem:[%s417 + $0x141] sm:$0xff]
      %v607 = vld [vmem:[%s417 + $0x151] sm:$0xff]
      %v608 = vld [vmem:[%s417 + $0x159] sm:$0xff]
      %v609 = vld [vmem:[%s417 + $0x169] sm:$0xff]
      %v610 = vld [vmem:[%s417 + $0x171] sm:$0xff]
      %v611 = vld [vmem:[%s417 + $0x2] sm:$0xff]
      %v612 = vld [vmem:[%s417 + $0xa] sm:$0xff]
      %v613 = vld [vmem:[%s417 + $0x1a] sm:$0xff]
      %v614 = vld [vmem:[%s417 + $0x22] sm:$0xff]
      %v615 = vld [vmem:[%s417 + $0x32] sm:$0xff]
      %v616 = vld [vmem:[%s417 + $0x3a] sm:$0xff]
      %v617 = vld [vmem:[%s417 + $0x4a] sm:$0xff]
      %v618 = vld [vmem:[%s417 + $0x52] sm:$0xff]
      %v619 = vld [vmem:[%s417 + $0x62] sm:$0xff]
      %v620 = vld [vmem:[%s417 + $0x6a] sm:$0xff]
      %v621 = vld [vmem:[%s417 + $0x7a] sm:$0xff]
      %v622 = vld [vmem:[%s417 + $0x82] sm:$0xff]
      %v623 = vld [vmem:[%s417 + $0x92] sm:$0xff]
      %v624 = vld [vmem:[%s417 + $0x9a] sm:$0xff]
      %v625 = vld [vmem:[%s417 + $0xaa] sm:$0xff]
      %v626 = vld [vmem:[%s417 + $0xb2] sm:$0xff]
      %v627 = vld [vmem:[%s417 + $0xc2] sm:$0xff]
      %v628 = vld [vmem:[%s417 + $0xca] sm:$0xff]
      %v629 = vld [vmem:[%s417 + $0xda] sm:$0xff]
      %v630 = vld [vmem:[%s417 + $0xe2] sm:$0xff]
      %v631 = vld [vmem:[%s417 + $0xf2] sm:$0xff]
      %v632 = vld [vmem:[%s417 + $0xfa] sm:$0xff]
      %v633 = vld [vmem:[%s417 + $0x10a] sm:$0xff]
      %v634 = vld [vmem:[%s417 + $0x112] sm:$0xff]
      %v635 = vld [vmem:[%s417 + $0x122] sm:$0xff]
      %v636 = vld [vmem:[%s417 + $0x12a] sm:$0xff]
      %v637 = vld [vmem:[%s417 + $0x13a] sm:$0xff]
      %v638 = vld [vmem:[%s417 + $0x142] sm:$0xff]
      %v639 = vld [vmem:[%s417 + $0x152] sm:$0xff]
      %v640 = vld [vmem:[%s417 + $0x15a] sm:$0xff]
      %v641 = vld [vmem:[%s417 + $0x16a] sm:$0xff]
      %v642 = vld [vmem:[%s417 + $0x172] sm:$0xff]
      %s643 = scalar_lea.vmem [#allocation2], 48
      %v644 = vld [vmem:[%s643] sm:$0xff]
      %v645 = vld [vmem:[%s643 + $0x8] sm:$0xff]
      %v646 = vld [vmem:[%s643 + $0x18] sm:$0xff]
      %v647 = vld [vmem:[%s643 + $0x20] sm:$0xff]
      %v648 = vld [vmem:[%s643 + $0x30] sm:$0xff]
      %v649 = vld [vmem:[%s643 + $0x38] sm:$0xff]
      %v650 = vld [vmem:[%s643 + $0x48] sm:$0xff]
      %v651 = vld [vmem:[%s643 + $0x50] sm:$0xff]
      %v652 = vld [vmem:[%s643 + $0x60] sm:$0xff]
      %v653 = vld [vmem:[%s643 + $0x68] sm:$0xff]
      %v654 = vld [vmem:[%s643 + $0x78] sm:$0xff]
      %v655 = vld [vmem:[%s643 + $0x80] sm:$0xff]
      %v656 = vld [vmem:[%s643 + $0x90] sm:$0xff]
      %v657 = vld [vmem:[%s643 + $0x98] sm:$0xff]
      %v658 = vld [vmem:[%s643 + $0xa8] sm:$0xff]
      %v659 = vld [vmem:[%s643 + $0xb0] sm:$0xff]
      %v660 = vld [vmem:[%s643 + $0xc0] sm:$0xff]
      %v661 = vld [vmem:[%s643 + $0xc8] sm:$0xff]
      %v662 = vld [vmem:[%s643 + $0xd8] sm:$0xff]
      %v663 = vld [vmem:[%s643 + $0xe0] sm:$0xff]
      %v664 = vld [vmem:[%s643 + $0xf0] sm:$0xff]
      %v665 = vld [vmem:[%s643 + $0xf8] sm:$0xff]
      %v666 = vld [vmem:[%s643 + $0x108] sm:$0xff]
      %v667 = vld [vmem:[%s643 + $0x110] sm:$0xff]
      %v668 = vld [vmem:[%s643 + $0x120] sm:$0xff]
      %v669 = vld [vmem:[%s643 + $0x128] sm:$0xff]
      %v670 = vld [vmem:[%s643 + $0x138] sm:$0xff]
      %v671 = vld [vmem:[%s643 + $0x140] sm:$0xff]
      %v672 = vld [vmem:[%s643 + $0x150] sm:$0xff]
      %v673 = vld [vmem:[%s643 + $0x158] sm:$0xff]
      %v674 = vld [vmem:[%s643 + $0x168] sm:$0xff]
      %v675 = vld [vmem:[%s643 + $0x170] sm:$0xff]
      %v676 = vld [vmem:[%s643 + $0x1] sm:$0xff]
      %v677 = vld [vmem:[%s643 + $0x9] sm:$0xff]
      %v678 = vld [vmem:[%s643 + $0x19] sm:$0xff]
      %v679 = vld [vmem:[%s643 + $0x21] sm:$0xff]
      %v680 = vld [vmem:[%s643 + $0x31] sm:$0xff]
      %v681 = vld [vmem:[%s643 + $0x39] sm:$0xff]
      %v682 = vld [vmem:[%s643 + $0x49] sm:$0xff]
      %v683 = vld [vmem:[%s643 + $0x51] sm:$0xff]
      %v684 = vld [vmem:[%s643 + $0x61] sm:$0xff]
      %v685 = vld [vmem:[%s643 + $0x69] sm:$0xff]
      %v686 = vld [vmem:[%s643 + $0x79] sm:$0xff]
      %v687 = vld [vmem:[%s643 + $0x81] sm:$0xff]
      %v688 = vld [vmem:[%s643 + $0x91] sm:$0xff]
      %v689 = vld [vmem:[%s643 + $0x99] sm:$0xff]
      %v690 = vld [vmem:[%s643 + $0xa9] sm:$0xff]
      %v691 = vld [vmem:[%s643 + $0xb1] sm:$0xff]
      %v692 = vld [vmem:[%s643 + $0xc1] sm:$0xff]
      %v693 = vld [vmem:[%s643 + $0xc9] sm:$0xff]
      %v694 = vld [vmem:[%s643 + $0xd9] sm:$0xff]
      %v695 = vld [vmem:[%s643 + $0xe1] sm:$0xff]
      %v696 = vld [vmem:[%s643 + $0xf1] sm:$0xff]
      %v697 = vld [vmem:[%s643 + $0xf9] sm:$0xff]
      %v698 = vld [vmem:[%s643 + $0x109] sm:$0xff]
      %v699 = vld [vmem:[%s643 + $0x111] sm:$0xff]
      %v700 = vld [vmem:[%s643 + $0x121] sm:$0xff]
      %v701 = vld [vmem:[%s643 + $0x129] sm:$0xff]
      %v702 = vld [vmem:[%s643 + $0x139] sm:$0xff]
      %v703 = vld [vmem:[%s643 + $0x141] sm:$0xff]
      %v704 = vld [vmem:[%s643 + $0x151] sm:$0xff]
      %v705 = vld [vmem:[%s643 + $0x159] sm:$0xff]
      %v706 = vld [vmem:[%s643 + $0x169] sm:$0xff]
      %v707 = vld [vmem:[%s643 + $0x171] sm:$0xff]
      %v708 = vld [vmem:[%s643 + $0x2] sm:$0xff]
      %v709 = vld [vmem:[%s643 + $0xa] sm:$0xff]
      %v710 = vld [vmem:[%s643 + $0x1a] sm:$0xff]
      %v711 = vld [vmem:[%s643 + $0x22] sm:$0xff]
      %v712 = vld [vmem:[%s643 + $0x32] sm:$0xff]
      %v713 = vld [vmem:[%s643 + $0x3a] sm:$0xff]
      %v714 = vld [vmem:[%s643 + $0x4a] sm:$0xff]
      %v715 = vld [vmem:[%s643 + $0x52] sm:$0xff]
      %v716 = vld [vmem:[%s643 + $0x62] sm:$0xff]
      %v717 = vld [vmem:[%s643 + $0x6a] sm:$0xff]
      %v718 = vld [vmem:[%s643 + $0x7a] sm:$0xff]
      %v719 = vld [vmem:[%s643 + $0x82] sm:$0xff]
      %v720 = vld [vmem:[%s643 + $0x92] sm:$0xff]
      %v721 = vld [vmem:[%s643 + $0x9a] sm:$0xff]
      %v722 = vld [vmem:[%s643 + $0xaa] sm:$0xff]
      %v723 = vld [vmem:[%s643 + $0xb2] sm:$0xff]
      %v724 = vld [vmem:[%s643 + $0xc2] sm:$0xff]
      %v725 = vld [vmem:[%s643 + $0xca] sm:$0xff]
      %v726 = vld [vmem:[%s643 + $0xda] sm:$0xff]
      %v727 = vld [vmem:[%s643 + $0xe2] sm:$0xff]
      %v728 = vld [vmem:[%s643 + $0xf2] sm:$0xff]
      %v729 = vld [vmem:[%s643 + $0xfa] sm:$0xff]
      %v730 = vld [vmem:[%s643 + $0x10a] sm:$0xff]
      %v731 = vld [vmem:[%s643 + $0x112] sm:$0xff]
      %v732 = vld [vmem:[%s643 + $0x122] sm:$0xff]
      %v733 = vld [vmem:[%s643 + $0x12a] sm:$0xff]
      %v734 = vld [vmem:[%s643 + $0x13a] sm:$0xff]
      %v735 = vld [vmem:[%s643 + $0x142] sm:$0xff]
      %v736 = vld [vmem:[%s643 + $0x152] sm:$0xff]
      %v737 = vld [vmem:[%s643 + $0x15a] sm:$0xff]
      %v738 = vld [vmem:[%s643 + $0x16a] sm:$0xff]
      %v739 = vld [vmem:[%s643 + $0x172] sm:$0xff]
      %772 = vrot.lane.b32.xlu0 %v483, 8
      %v773 = vpop.permute.xlu0 %772
      %774 = vrot.lane.b32.xlu0 %v484, 8
      %v775 = vpop.permute.xlu0 %774
      %776 = vrot.lane.b32.xlu0 %v485, 8
      %v777 = vpop.permute.xlu0 %776
      %778 = vrot.lane.b32.xlu0 %v486, 8
      %v779 = vpop.permute.xlu0 %778
      %780 = vrot.lane.b32.xlu0 %v487, 8
      %v781 = vpop.permute.xlu0 %780
      %782 = vrot.lane.b32.xlu0 %v488, 8
      %v783 = vpop.permute.xlu0 %782
      %784 = vrot.lane.b32.xlu0 %v489, 8
      %v785 = vpop.permute.xlu0 %784
      %786 = vrot.lane.b32.xlu0 %v490, 8
      %v787 = vpop.permute.xlu0 %786
      %788 = vrot.lane.b32.xlu0 %v491, 8
      %v789 = vpop.permute.xlu0 %788
      %790 = vrot.lane.b32.xlu0 %v492, 8
      %v791 = vpop.permute.xlu0 %790
      %792 = vrot.lane.b32.xlu0 %v493, 8
      %v793 = vpop.permute.xlu0 %792
      %794 = vrot.lane.b32.xlu0 %v494, 8
      %v795 = vpop.permute.xlu0 %794
      %796 = vrot.lane.b32.xlu0 %v495, 8
      %v797 = vpop.permute.xlu0 %796
      %798 = vrot.lane.b32.xlu0 %v496, 8
      %v799 = vpop.permute.xlu0 %798
      %800 = vrot.lane.b32.xlu0 %v497, 8
      %v801 = vpop.permute.xlu0 %800
      %802 = vrot.lane.b32.xlu0 %v498, 8
      %v803 = vpop.permute.xlu0 %802
      %804 = vrot.lane.b32.xlu0 %v499, 8
      %v805 = vpop.permute.xlu0 %804
      %806 = vrot.lane.b32.xlu0 %v500, 8
      %v807 = vpop.permute.xlu0 %806
      %808 = vrot.lane.b32.xlu0 %v501, 8
      %v809 = vpop.permute.xlu0 %808
      %810 = vrot.lane.b32.xlu0 %v502, 8
      %v811 = vpop.permute.xlu0 %810
      %812 = vrot.lane.b32.xlu0 %v503, 8
      %v813 = vpop.permute.xlu0 %812
      %814 = vrot.lane.b32.xlu0 %v504, 8
      %v815 = vpop.permute.xlu0 %814
      %816 = vrot.lane.b32.xlu0 %v505, 8
      %v817 = vpop.permute.xlu0 %816
      %818 = vrot.lane.b32.xlu0 %v506, 8
      %v819 = vpop.permute.xlu0 %818
      %820 = vrot.lane.b32.xlu0 %v507, 8
      %v821 = vpop.permute.xlu0 %820
      %822 = vrot.lane.b32.xlu0 %v508, 8
      %v823 = vpop.permute.xlu0 %822
      %824 = vrot.lane.b32.xlu0 %v509, 8
      %v825 = vpop.permute.xlu0 %824
      %826 = vrot.lane.b32.xlu0 %v510, 8
      %v827 = vpop.permute.xlu0 %826
      %828 = vrot.lane.b32.xlu0 %v511, 8
      %v829 = vpop.permute.xlu0 %828
      %830 = vrot.lane.b32.xlu0 %v512, 8
      %v831 = vpop.permute.xlu0 %830
      %832 = vrot.lane.b32.xlu0 %v513, 8
      %v833 = vpop.permute.xlu0 %832
      %834 = vrot.lane.b32.xlu0 %v514, 8
      %v835 = vpop.permute.xlu0 %834
      %900 = vrot.lane.b32.xlu0 %v515, 16
      %v901 = vpop.permute.xlu0 %900
      %902 = vrot.lane.b32.xlu0 %v516, 16
      %v903 = vpop.permute.xlu0 %902
      %904 = vrot.lane.b32.xlu0 %v517, 16
      %v905 = vpop.permute.xlu0 %904
      %906 = vrot.lane.b32.xlu0 %v518, 16
      %v907 = vpop.permute.xlu0 %906
      %908 = vrot.lane.b32.xlu0 %v519, 16
      %v909 = vpop.permute.xlu0 %908
      %910 = vrot.lane.b32.xlu0 %v520, 16
      %v911 = vpop.permute.xlu0 %910
      %912 = vrot.lane.b32.xlu0 %v521, 16
      %v913 = vpop.permute.xlu0 %912
      %914 = vrot.lane.b32.xlu0 %v522, 16
      %v915 = vpop.permute.xlu0 %914
      %916 = vrot.lane.b32.xlu0 %v523, 16
      %v917 = vpop.permute.xlu0 %916
      %918 = vrot.lane.b32.xlu0 %v524, 16
      %v919 = vpop.permute.xlu0 %918
      %920 = vrot.lane.b32.xlu0 %v525, 16
      %v921 = vpop.permute.xlu0 %920
      %922 = vrot.lane.b32.xlu0 %v526, 16
      %v923 = vpop.permute.xlu0 %922
      %924 = vrot.lane.b32.xlu0 %v527, 16
      %v925 = vpop.permute.xlu0 %924
      %926 = vrot.lane.b32.xlu0 %v528, 16
      %v927 = vpop.permute.xlu0 %926
      %928 = vrot.lane.b32.xlu0 %v529, 16
      %v929 = vpop.permute.xlu0 %928
      %930 = vrot.lane.b32.xlu0 %v530, 16
      %v931 = vpop.permute.xlu0 %930
      %932 = vrot.lane.b32.xlu0 %v531, 16
      %v933 = vpop.permute.xlu0 %932
      %934 = vrot.lane.b32.xlu0 %v532, 16
      %v935 = vpop.permute.xlu0 %934
      %936 = vrot.lane.b32.xlu0 %v533, 16
      %v937 = vpop.permute.xlu0 %936
      %938 = vrot.lane.b32.xlu0 %v534, 16
      %v939 = vpop.permute.xlu0 %938
      %940 = vrot.lane.b32.xlu0 %v535, 16
      %v941 = vpop.permute.xlu0 %940
      %942 = vrot.lane.b32.xlu0 %v536, 16
      %v943 = vpop.permute.xlu0 %942
      %944 = vrot.lane.b32.xlu0 %v537, 16
      %v945 = vpop.permute.xlu0 %944
      %946 = vrot.lane.b32.xlu0 %v538, 16
      %v947 = vpop.permute.xlu0 %946
      %948 = vrot.lane.b32.xlu0 %v539, 16
      %v949 = vpop.permute.xlu0 %948
      %950 = vrot.lane.b32.xlu0 %v540, 16
      %v951 = vpop.permute.xlu0 %950
      %952 = vrot.lane.b32.xlu0 %v541, 16
      %v953 = vpop.permute.xlu0 %952
      %954 = vrot.lane.b32.xlu0 %v542, 16
      %v955 = vpop.permute.xlu0 %954
      %956 = vrot.lane.b32.xlu0 %v543, 16
      %v957 = vpop.permute.xlu0 %956
      %958 = vrot.lane.b32.xlu0 %v544, 16
      %v959 = vpop.permute.xlu0 %958
      %960 = vrot.lane.b32.xlu0 %v545, 16
      %v961 = vpop.permute.xlu0 %960
      %962 = vrot.lane.b32.xlu0 %v546, 16
      %v963 = vpop.permute.xlu0 %962
      %1028 = vrot.lane.b32.xlu0 %v547, 24
      %v1029 = vpop.permute.xlu0 %1028
      %1030 = vrot.lane.b32.xlu0 %v548, 24
      %v1031 = vpop.permute.xlu0 %1030
      %1032 = vrot.lane.b32.xlu0 %v549, 24
      %v1033 = vpop.permute.xlu0 %1032
      %1034 = vrot.lane.b32.xlu0 %v550, 24
      %v1035 = vpop.permute.xlu0 %1034
      %1036 = vrot.lane.b32.xlu0 %v551, 24
      %v1037 = vpop.permute.xlu0 %1036
      %1038 = vrot.lane.b32.xlu0 %v552, 24
      %v1039 = vpop.permute.xlu0 %1038
      %1040 = vrot.lane.b32.xlu0 %v553, 24
      %v1041 = vpop.permute.xlu0 %1040
      %1042 = vrot.lane.b32.xlu0 %v554, 24
      %v1043 = vpop.permute.xlu0 %1042
      %1044 = vrot.lane.b32.xlu0 %v555, 24
      %v1045 = vpop.permute.xlu0 %1044
      %1046 = vrot.lane.b32.xlu0 %v556, 24
      %v1047 = vpop.permute.xlu0 %1046
      %1048 = vrot.lane.b32.xlu0 %v557, 24
      %v1049 = vpop.permute.xlu0 %1048
      %1050 = vrot.lane.b32.xlu0 %v558, 24
      %v1051 = vpop.permute.xlu0 %1050
      %1052 = vrot.lane.b32.xlu0 %v559, 24
      %v1053 = vpop.permute.xlu0 %1052
      %1054 = vrot.lane.b32.xlu0 %v560, 24
      %v1055 = vpop.permute.xlu0 %1054
      %1056 = vrot.lane.b32.xlu0 %v561, 24
      %v1057 = vpop.permute.xlu0 %1056
      %1058 = vrot.lane.b32.xlu0 %v562, 24
      %v1059 = vpop.permute.xlu0 %1058
      %1060 = vrot.lane.b32.xlu0 %v563, 24
      %v1061 = vpop.permute.xlu0 %1060
      %1062 = vrot.lane.b32.xlu0 %v564, 24
      %v1063 = vpop.permute.xlu0 %1062
      %1064 = vrot.lane.b32.xlu0 %v565, 24
      %v1065 = vpop.permute.xlu0 %1064
      %1066 = vrot.lane.b32.xlu0 %v566, 24
      %v1067 = vpop.permute.xlu0 %1066
      %1068 = vrot.lane.b32.xlu0 %v567, 24
      %v1069 = vpop.permute.xlu0 %1068
      %1070 = vrot.lane.b32.xlu0 %v568, 24
      %v1071 = vpop.permute.xlu0 %1070
      %1072 = vrot.lane.b32.xlu0 %v569, 24
      %v1073 = vpop.permute.xlu0 %1072
      %1074 = vrot.lane.b32.xlu0 %v570, 24
      %v1075 = vpop.permute.xlu0 %1074
      %1076 = vrot.lane.b32.xlu0 %v571, 24
      %v1077 = vpop.permute.xlu0 %1076
      %1078 = vrot.lane.b32.xlu0 %v572, 24
      %v1079 = vpop.permute.xlu0 %1078
      %1080 = vrot.lane.b32.xlu0 %v573, 24
      %v1081 = vpop.permute.xlu0 %1080
      %1082 = vrot.lane.b32.xlu0 %v574, 24
      %v1083 = vpop.permute.xlu0 %1082
      %1084 = vrot.lane.b32.xlu0 %v575, 24
      %v1085 = vpop.permute.xlu0 %1084
      %1086 = vrot.lane.b32.xlu0 %v576, 24
      %v1087 = vpop.permute.xlu0 %1086
      %1088 = vrot.lane.b32.xlu0 %v577, 24
      %v1089 = vpop.permute.xlu0 %1088
      %1090 = vrot.lane.b32.xlu0 %v578, 24
      %v1091 = vpop.permute.xlu0 %1090
      %1156 = vrot.lane.b32.xlu0 %v579, 32
      %v1157 = vpop.permute.xlu0 %1156
      %1158 = vrot.lane.b32.xlu0 %v580, 32
      %v1159 = vpop.permute.xlu0 %1158
      %1160 = vrot.lane.b32.xlu0 %v581, 32
      %v1161 = vpop.permute.xlu0 %1160
      %1162 = vrot.lane.b32.xlu0 %v582, 32
      %v1163 = vpop.permute.xlu0 %1162
      %1164 = vrot.lane.b32.xlu0 %v583, 32
      %v1165 = vpop.permute.xlu0 %1164
      %1166 = vrot.lane.b32.xlu0 %v584, 32
      %v1167 = vpop.permute.xlu0 %1166
      %1168 = vrot.lane.b32.xlu0 %v585, 32
      %v1169 = vpop.permute.xlu0 %1168
      %1170 = vrot.lane.b32.xlu0 %v586, 32
      %v1171 = vpop.permute.xlu0 %1170
      %1172 = vrot.lane.b32.xlu0 %v587, 32
      %v1173 = vpop.permute.xlu0 %1172
      %1174 = vrot.lane.b32.xlu0 %v588, 32
      %v1175 = vpop.permute.xlu0 %1174
      %1176 = vrot.lane.b32.xlu0 %v589, 32
      %v1177 = vpop.permute.xlu0 %1176
      %1178 = vrot.lane.b32.xlu0 %v590, 32
      %v1179 = vpop.permute.xlu0 %1178
      %1180 = vrot.lane.b32.xlu0 %v591, 32
      %v1181 = vpop.permute.xlu0 %1180
      %1182 = vrot.lane.b32.xlu0 %v592, 32
      %v1183 = vpop.permute.xlu0 %1182
      %1184 = vrot.lane.b32.xlu0 %v593, 32
      %v1185 = vpop.permute.xlu0 %1184
      %1186 = vrot.lane.b32.xlu0 %v594, 32
      %v1187 = vpop.permute.xlu0 %1186
      %1188 = vrot.lane.b32.xlu0 %v595, 32
      %v1189 = vpop.permute.xlu0 %1188
      %1190 = vrot.lane.b32.xlu0 %v596, 32
      %v1191 = vpop.permute.xlu0 %1190
      %1192 = vrot.lane.b32.xlu0 %v597, 32
      %v1193 = vpop.permute.xlu0 %1192
      %1194 = vrot.lane.b32.xlu0 %v598, 32
      %v1195 = vpop.permute.xlu0 %1194
      %1196 = vrot.lane.b32.xlu0 %v599, 32
      %v1197 = vpop.permute.xlu0 %1196
      %1198 = vrot.lane.b32.xlu0 %v600, 32
      %v1199 = vpop.permute.xlu0 %1198
      %1200 = vrot.lane.b32.xlu0 %v601, 32
      %v1201 = vpop.permute.xlu0 %1200
      %1202 = vrot.lane.b32.xlu0 %v602, 32
      %v1203 = vpop.permute.xlu0 %1202
      %1204 = vrot.lane.b32.xlu0 %v603, 32
      %v1205 = vpop.permute.xlu0 %1204
      %1206 = vrot.lane.b32.xlu0 %v604, 32
      %v1207 = vpop.permute.xlu0 %1206
      %1208 = vrot.lane.b32.xlu0 %v605, 32
      %v1209 = vpop.permute.xlu0 %1208
      %1210 = vrot.lane.b32.xlu0 %v606, 32
      %v1211 = vpop.permute.xlu0 %1210
      %1212 = vrot.lane.b32.xlu0 %v607, 32
      %v1213 = vpop.permute.xlu0 %1212
      %1214 = vrot.lane.b32.xlu0 %v608, 32
      %v1215 = vpop.permute.xlu0 %1214
      %1216 = vrot.lane.b32.xlu0 %v609, 32
      %v1217 = vpop.permute.xlu0 %1216
      %1218 = vrot.lane.b32.xlu0 %v610, 32
      %v1219 = vpop.permute.xlu0 %1218
      %1284 = vrot.lane.b32.xlu0 %v611, 40
      %v1285 = vpop.permute.xlu0 %1284
      %1286 = vrot.lane.b32.xlu0 %v612, 40
      %v1287 = vpop.permute.xlu0 %1286
      %1288 = vrot.lane.b32.xlu0 %v613, 40
      %v1289 = vpop.permute.xlu0 %1288
      %1290 = vrot.lane.b32.xlu0 %v614, 40
      %v1291 = vpop.permute.xlu0 %1290
      %1292 = vrot.lane.b32.xlu0 %v615, 40
      %v1293 = vpop.permute.xlu0 %1292
      %1294 = vrot.lane.b32.xlu0 %v616, 40
      %v1295 = vpop.permute.xlu0 %1294
      %1296 = vrot.lane.b32.xlu0 %v617, 40
      %v1297 = vpop.permute.xlu0 %1296
      %1298 = vrot.lane.b32.xlu0 %v618, 40
      %v1299 = vpop.permute.xlu0 %1298
      %1300 = vrot.lane.b32.xlu0 %v619, 40
      %v1301 = vpop.permute.xlu0 %1300
      %1302 = vrot.lane.b32.xlu0 %v620, 40
      %v1303 = vpop.permute.xlu0 %1302
      %1304 = vrot.lane.b32.xlu0 %v621, 40
      %v1305 = vpop.permute.xlu0 %1304
      %1306 = vrot.lane.b32.xlu0 %v622, 40
      %v1307 = vpop.permute.xlu0 %1306
      %1308 = vrot.lane.b32.xlu0 %v623, 40
      %v1309 = vpop.permute.xlu0 %1308
      %1310 = vrot.lane.b32.xlu0 %v624, 40
      %v1311 = vpop.permute.xlu0 %1310
      %1312 = vrot.lane.b32.xlu0 %v625, 40
      %v1313 = vpop.permute.xlu0 %1312
      %1314 = vrot.lane.b32.xlu0 %v626, 40
      %v1315 = vpop.permute.xlu0 %1314
      %1316 = vrot.lane.b32.xlu0 %v627, 40
      %v1317 = vpop.permute.xlu0 %1316
      %1318 = vrot.lane.b32.xlu0 %v628, 40
      %v1319 = vpop.permute.xlu0 %1318
      %1320 = vrot.lane.b32.xlu0 %v629, 40
      %v1321 = vpop.permute.xlu0 %1320
      %1322 = vrot.lane.b32.xlu0 %v630, 40
      %v1323 = vpop.permute.xlu0 %1322
      %1324 = vrot.lane.b32.xlu0 %v631, 40
      %v1325 = vpop.permute.xlu0 %1324
      %1326 = vrot.lane.b32.xlu0 %v632, 40
      %v1327 = vpop.permute.xlu0 %1326
      %1328 = vrot.lane.b32.xlu0 %v633, 40
      %v1329 = vpop.permute.xlu0 %1328
      %1330 = vrot.lane.b32.xlu0 %v634, 40
      %v1331 = vpop.permute.xlu0 %1330
      %1332 = vrot.lane.b32.xlu0 %v635, 40
      %v1333 = vpop.permute.xlu0 %1332
      %1334 = vrot.lane.b32.xlu0 %v636, 40
      %v1335 = vpop.permute.xlu0 %1334
      %1336 = vrot.lane.b32.xlu0 %v637, 40
      %v1337 = vpop.permute.xlu0 %1336
      %1338 = vrot.lane.b32.xlu0 %v638, 40
      %v1339 = vpop.permute.xlu0 %1338
      %1340 = vrot.lane.b32.xlu0 %v639, 40
      %v1341 = vpop.permute.xlu0 %1340
      %1342 = vrot.lane.b32.xlu0 %v640, 40
      %v1343 = vpop.permute.xlu0 %1342
      %1344 = vrot.lane.b32.xlu0 %v641, 40
      %v1345 = vpop.permute.xlu0 %1344
      %1346 = vrot.lane.b32.xlu0 %v642, 40
      %v1347 = vpop.permute.xlu0 %1346
      %1412 = vrot.lane.b32.xlu0 %v644, 48
      %v1413 = vpop.permute.xlu0 %1412
      %1414 = vrot.lane.b32.xlu0 %v645, 48
      %v1415 = vpop.permute.xlu0 %1414
      %1416 = vrot.lane.b32.xlu0 %v646, 48
      %v1417 = vpop.permute.xlu0 %1416
      %1418 = vrot.lane.b32.xlu0 %v647, 48
      %v1419 = vpop.permute.xlu0 %1418
      %1420 = vrot.lane.b32.xlu0 %v648, 48
      %v1421 = vpop.permute.xlu0 %1420
      %1422 = vrot.lane.b32.xlu0 %v649, 48
      %v1423 = vpop.permute.xlu0 %1422
      %1424 = vrot.lane.b32.xlu0 %v650, 48
      %v1425 = vpop.permute.xlu0 %1424
      %1426 = vrot.lane.b32.xlu0 %v651, 48
      %v1427 = vpop.permute.xlu0 %1426
      %1428 = vrot.lane.b32.xlu0 %v652, 48
      %v1429 = vpop.permute.xlu0 %1428
      %1430 = vrot.lane.b32.xlu0 %v653, 48
      %v1431 = vpop.permute.xlu0 %1430
      %1432 = vrot.lane.b32.xlu0 %v654, 48
      %v1433 = vpop.permute.xlu0 %1432
      %1434 = vrot.lane.b32.xlu0 %v655, 48
      %v1435 = vpop.permute.xlu0 %1434
      %1436 = vrot.lane.b32.xlu0 %v656, 48
      %v1437 = vpop.permute.xlu0 %1436
      %1438 = vrot.lane.b32.xlu0 %v657, 48
      %v1439 = vpop.permute.xlu0 %1438
      %1440 = vrot.lane.b32.xlu0 %v658, 48
      %v1441 = vpop.permute.xlu0 %1440
      %1442 = vrot.lane.b32.xlu0 %v659, 48
      %v1443 = vpop.permute.xlu0 %1442
      %1444 = vrot.lane.b32.xlu0 %v660, 48
      %v1445 = vpop.permute.xlu0 %1444
      %1446 = vrot.lane.b32.xlu0 %v661, 48
      %v1447 = vpop.permute.xlu0 %1446
      %1448 = vrot.lane.b32.xlu0 %v662, 48
      %v1449 = vpop.permute.xlu0 %1448
      %1450 = vrot.lane.b32.xlu0 %v663, 48
      %v1451 = vpop.permute.xlu0 %1450
      %1452 = vrot.lane.b32.xlu0 %v664, 48
      %v1453 = vpop.permute.xlu0 %1452
      %1454 = vrot.lane.b32.xlu0 %v665, 48
      %v1455 = vpop.permute.xlu0 %1454
      %1456 = vrot.lane.b32.xlu0 %v666, 48
      %v1457 = vpop.permute.xlu0 %1456
      %1458 = vrot.lane.b32.xlu0 %v667, 48
      %v1459 = vpop.permute.xlu0 %1458
      %1460 = vrot.lane.b32.xlu0 %v668, 48
      %v1461 = vpop.permute.xlu0 %1460
      %1462 = vrot.lane.b32.xlu0 %v669, 48
      %v1463 = vpop.permute.xlu0 %1462
      %1464 = vrot.lane.b32.xlu0 %v670, 48
      %v1465 = vpop.permute.xlu0 %1464
      %1466 = vrot.lane.b32.xlu0 %v671, 48
      %v1467 = vpop.permute.xlu0 %1466
      %1468 = vrot.lane.b32.xlu0 %v672, 48
      %v1469 = vpop.permute.xlu0 %1468
      %1470 = vrot.lane.b32.xlu0 %v673, 48
      %v1471 = vpop.permute.xlu0 %1470
      %1472 = vrot.lane.b32.xlu0 %v674, 48
      %v1473 = vpop.permute.xlu0 %1472
      %1474 = vrot.lane.b32.xlu0 %v675, 48
      %v1475 = vpop.permute.xlu0 %1474
      %1540 = vrot.lane.b32.xlu0 %v676, 56
      %v1541 = vpop.permute.xlu0 %1540
      %1542 = vrot.lane.b32.xlu0 %v677, 56
      %v1543 = vpop.permute.xlu0 %1542
      %1544 = vrot.lane.b32.xlu0 %v678, 56
      %v1545 = vpop.permute.xlu0 %1544
      %1546 = vrot.lane.b32.xlu0 %v679, 56
      %v1547 = vpop.permute.xlu0 %1546
      %1548 = vrot.lane.b32.xlu0 %v680, 56
      %v1549 = vpop.permute.xlu0 %1548
      %1550 = vrot.lane.b32.xlu0 %v681, 56
      %v1551 = vpop.permute.xlu0 %1550
      %1552 = vrot.lane.b32.xlu0 %v682, 56
      %v1553 = vpop.permute.xlu0 %1552
      %1554 = vrot.lane.b32.xlu0 %v683, 56
      %v1555 = vpop.permute.xlu0 %1554
      %1556 = vrot.lane.b32.xlu0 %v684, 56
      %v1557 = vpop.permute.xlu0 %1556
      %1558 = vrot.lane.b32.xlu0 %v685, 56
      %v1559 = vpop.permute.xlu0 %1558
      %1560 = vrot.lane.b32.xlu0 %v686, 56
      %v1561 = vpop.permute.xlu0 %1560
      %1562 = vrot.lane.b32.xlu0 %v687, 56
      %v1563 = vpop.permute.xlu0 %1562
      %1564 = vrot.lane.b32.xlu0 %v688, 56
      %v1565 = vpop.permute.xlu0 %1564
      %1566 = vrot.lane.b32.xlu0 %v689, 56
      %v1567 = vpop.permute.xlu0 %1566
      %1568 = vrot.lane.b32.xlu0 %v690, 56
      %v1569 = vpop.permute.xlu0 %1568
      %1570 = vrot.lane.b32.xlu0 %v691, 56
      %v1571 = vpop.permute.xlu0 %1570
      %1572 = vrot.lane.b32.xlu0 %v692, 56
      %v1573 = vpop.permute.xlu0 %1572
      %1574 = vrot.lane.b32.xlu0 %v693, 56
      %v1575 = vpop.permute.xlu0 %1574
      %1576 = vrot.lane.b32.xlu0 %v694, 56
      %v1577 = vpop.permute.xlu0 %1576
      %1578 = vrot.lane.b32.xlu0 %v695, 56
      %v1579 = vpop.permute.xlu0 %1578
      %1580 = vrot.lane.b32.xlu0 %v696, 56
      %v1581 = vpop.permute.xlu0 %1580
      %1582 = vrot.lane.b32.xlu0 %v697, 56
      %v1583 = vpop.permute.xlu0 %1582
      %1584 = vrot.lane.b32.xlu0 %v698, 56
      %v1585 = vpop.permute.xlu0 %1584
      %1586 = vrot.lane.b32.xlu0 %v699, 56
      %v1587 = vpop.permute.xlu0 %1586
      %1588 = vrot.lane.b32.xlu0 %v700, 56
      %v1589 = vpop.permute.xlu0 %1588
      %1590 = vrot.lane.b32.xlu0 %v701, 56
      %v1591 = vpop.permute.xlu0 %1590
      %1592 = vrot.lane.b32.xlu0 %v702, 56
      %v1593 = vpop.permute.xlu0 %1592
      %1594 = vrot.lane.b32.xlu0 %v703, 56
      %v1595 = vpop.permute.xlu0 %1594
      %1596 = vrot.lane.b32.xlu0 %v704, 56
      %v1597 = vpop.permute.xlu0 %1596
      %1598 = vrot.lane.b32.xlu0 %v705, 56
      %v1599 = vpop.permute.xlu0 %1598
      %1600 = vrot.lane.b32.xlu0 %v706, 56
      %v1601 = vpop.permute.xlu0 %1600
      %1602 = vrot.lane.b32.xlu0 %v707, 56
      %v1603 = vpop.permute.xlu0 %1602
      %1668 = vrot.lane.b32.xlu0 %v708, 64
      %v1669 = vpop.permute.xlu0 %1668
      %1670 = vrot.lane.b32.xlu0 %v709, 64
      %v1671 = vpop.permute.xlu0 %1670
      %1672 = vrot.lane.b32.xlu0 %v710, 64
      %v1673 = vpop.permute.xlu0 %1672
      %1674 = vrot.lane.b32.xlu0 %v711, 64
      %v1675 = vpop.permute.xlu0 %1674
      %1676 = vrot.lane.b32.xlu0 %v712, 64
      %v1677 = vpop.permute.xlu0 %1676
      %1678 = vrot.lane.b32.xlu0 %v713, 64
      %v1679 = vpop.permute.xlu0 %1678
      %1680 = vrot.lane.b32.xlu0 %v714, 64
      %v1681 = vpop.permute.xlu0 %1680
      %1682 = vrot.lane.b32.xlu0 %v715, 64
      %v1683 = vpop.permute.xlu0 %1682
      %1684 = vrot.lane.b32.xlu0 %v716, 64
      %v1685 = vpop.permute.xlu0 %1684
      %1686 = vrot.lane.b32.xlu0 %v717, 64
      %v1687 = vpop.permute.xlu0 %1686
      %1688 = vrot.lane.b32.xlu0 %v718, 64
      %v1689 = vpop.permute.xlu0 %1688
      %1690 = vrot.lane.b32.xlu0 %v719, 64
      %v1691 = vpop.permute.xlu0 %1690
      %1692 = vrot.lane.b32.xlu0 %v720, 64
      %v1693 = vpop.permute.xlu0 %1692
      %1694 = vrot.lane.b32.xlu0 %v721, 64
      %v1695 = vpop.permute.xlu0 %1694
      %1696 = vrot.lane.b32.xlu0 %v722, 64
      %v1697 = vpop.permute.xlu0 %1696
      %1698 = vrot.lane.b32.xlu0 %v723, 64
      %v1699 = vpop.permute.xlu0 %1698
      %1700 = vrot.lane.b32.xlu0 %v724, 64
      %v1701 = vpop.permute.xlu0 %1700
      %1702 = vrot.lane.b32.xlu0 %v725, 64
      %v1703 = vpop.permute.xlu0 %1702
      %1704 = vrot.lane.b32.xlu0 %v726, 64
      %v1705 = vpop.permute.xlu0 %1704
      %1706 = vrot.lane.b32.xlu0 %v727, 64
      %v1707 = vpop.permute.xlu0 %1706
      %1708 = vrot.lane.b32.xlu0 %v728, 64
      %v1709 = vpop.permute.xlu0 %1708
      %1710 = vrot.lane.b32.xlu0 %v729, 64
      %v1711 = vpop.permute.xlu0 %1710
      %1712 = vrot.lane.b32.xlu0 %v730, 64
      %v1713 = vpop.permute.xlu0 %1712
      %1714 = vrot.lane.b32.xlu0 %v731, 64
      %v1715 = vpop.permute.xlu0 %1714
      %1716 = vrot.lane.b32.xlu0 %v732, 64
      %v1717 = vpop.permute.xlu0 %1716
      %1718 = vrot.lane.b32.xlu0 %v733, 64
      %v1719 = vpop.permute.xlu0 %1718
      %1720 = vrot.lane.b32.xlu0 %v734, 64
      %v1721 = vpop.permute.xlu0 %1720
      %1722 = vrot.lane.b32.xlu0 %v735, 64
      %v1723 = vpop.permute.xlu0 %1722
      %1724 = vrot.lane.b32.xlu0 %v736, 64
      %v1725 = vpop.permute.xlu0 %1724
      %1726 = vrot.lane.b32.xlu0 %v737, 64
      %v1727 = vpop.permute.xlu0 %1726
      %1728 = vrot.lane.b32.xlu0 %v738, 64
      %v1729 = vpop.permute.xlu0 %1728
      %1730 = vrot.lane.b32.xlu0 %v739, 64
      %v1731 = vpop.permute.xlu0 %1730
      %v1764 = vsel %vm418, %v451, %v773
      %v1765 = vsel %vm418, %v452, %v775
      %v1766 = vsel %vm418, %v453, %v777
      %v1767 = vsel %vm418, %v454, %v779
      %v1768 = vsel %vm418, %v455, %v781
      %v1769 = vsel %vm418, %v456, %v783
      %v1770 = vsel %vm418, %v457, %v785
      %v1771 = vsel %vm418, %v458, %v787
      %v1772 = vsel %vm418, %v459, %v789
      %v1773 = vsel %vm418, %v460, %v791
      %v1774 = vsel %vm418, %v461, %v793
      %v1775 = vsel %vm418, %v462, %v795
      %v1776 = vsel %vm418, %v463, %v797
      %v1777 = vsel %vm418, %v464, %v799
      %v1778 = vsel %vm418, %v465, %v801
      %v1779 = vsel %vm418, %v466, %v803
      %v1780 = vsel %vm418, %v467, %v805
      %v1781 = vsel %vm418, %v468, %v807
      %v1782 = vsel %vm418, %v469, %v809
      %v1783 = vsel %vm418, %v470, %v811
      %v1784 = vsel %vm418, %v471, %v813
      %v1785 = vsel %vm418, %v472, %v815
      %v1786 = vsel %vm418, %v473, %v817
      %v1787 = vsel %vm418, %v474, %v819
      %v1788 = vsel %vm418, %v475, %v821
      %v1789 = vsel %vm418, %v476, %v823
      %v1790 = vsel %vm418, %v477, %v825
      %v1791 = vsel %vm418, %v478, %v827
      %v1792 = vsel %vm418, %v479, %v829
      %v1793 = vsel %vm418, %v480, %v831
      %v1794 = vsel %vm418, %v481, %v833
      %v1795 = vsel %vm418, %v482, %v835
      %vm1796 = vcmask 130048
      %v1797 = vsel %vm1796, %v1764, %v901
      %v1798 = vsel %vm1796, %v1765, %v903
      %v1799 = vsel %vm1796, %v1766, %v905
      %v1800 = vsel %vm1796, %v1767, %v907
      %v1801 = vsel %vm1796, %v1768, %v909
      %v1802 = vsel %vm1796, %v1769, %v911
      %v1803 = vsel %vm1796, %v1770, %v913
      %v1804 = vsel %vm1796, %v1771, %v915
      %v1805 = vsel %vm1796, %v1772, %v917
      %v1806 = vsel %vm1796, %v1773, %v919
      %v1807 = vsel %vm1796, %v1774, %v921
      %v1808 = vsel %vm1796, %v1775, %v923
      %v1809 = vsel %vm1796, %v1776, %v925
      %v1810 = vsel %vm1796, %v1777, %v927
      %v1811 = vsel %vm1796, %v1778, %v929
      %v1812 = vsel %vm1796, %v1779, %v931
      %v1813 = vsel %vm1796, %v1780, %v933
      %v1814 = vsel %vm1796, %v1781, %v935
      %v1815 = vsel %vm1796, %v1782, %v937
      %v1816 = vsel %vm1796, %v1783, %v939
      %v1817 = vsel %vm1796, %v1784, %v941
      %v1818 = vsel %vm1796, %v1785, %v943
      %v1819 = vsel %vm1796, %v1786, %v945
      %v1820 = vsel %vm1796, %v1787, %v947
      %v1821 = vsel %vm1796, %v1788, %v949
      %v1822 = vsel %vm1796, %v1789, %v951
      %v1823 = vsel %vm1796, %v1790, %v953
      %v1824 = vsel %vm1796, %v1791, %v955
      %v1825 = vsel %vm1796, %v1792, %v957
      %v1826 = vsel %vm1796, %v1793, %v959
      %v1827 = vsel %vm1796, %v1794, %v961
      %v1828 = vsel %vm1796, %v1795, %v963
      %vm1829 = vcmask 195584
      %v1830 = vsel %vm1829, %v1797, %v1029
      %v1831 = vsel %vm1829, %v1798, %v1031
      %v1832 = vsel %vm1829, %v1799, %v1033
      %v1833 = vsel %vm1829, %v1800, %v1035
      %v1834 = vsel %vm1829, %v1801, %v1037
      %v1835 = vsel %vm1829, %v1802, %v1039
      %v1836 = vsel %vm1829, %v1803, %v1041
      %v1837 = vsel %vm1829, %v1804, %v1043
      %v1838 = vsel %vm1829, %v1805, %v1045
      %v1839 = vsel %vm1829, %v1806, %v1047
      %v1840 = vsel %vm1829, %v1807, %v1049
      %v1841 = vsel %vm1829, %v1808, %v1051
      %v1842 = vsel %vm1829, %v1809, %v1053
      %v1843 = vsel %vm1829, %v1810, %v1055
      %v1844 = vsel %vm1829, %v1811, %v1057
      %v1845 = vsel %vm1829, %v1812, %v1059
      %v1846 = vsel %vm1829, %v1813, %v1061
      %v1847 = vsel %vm1829, %v1814, %v1063
      %v1848 = vsel %vm1829, %v1815, %v1065
      %v1849 = vsel %vm1829, %v1816, %v1067
      %v1850 = vsel %vm1829, %v1817, %v1069
      %v1851 = vsel %vm1829, %v1818, %v1071
      %v1852 = vsel %vm1829, %v1819, %v1073
      %v1853 = vsel %vm1829, %v1820, %v1075
      %v1854 = vsel %vm1829, %v1821, %v1077
      %v1855 = vsel %vm1829, %v1822, %v1079
      %v1856 = vsel %vm1829, %v1823, %v1081
      %v1857 = vsel %vm1829, %v1824, %v1083
      %v1858 = vsel %vm1829, %v1825, %v1085
      %v1859 = vsel %vm1829, %v1826, %v1087
      %v1860 = vsel %vm1829, %v1827, %v1089
      %v1861 = vsel %vm1829, %v1828, %v1091
      %vm1862 = vcmask 261120
      %v1863 = vsel %vm1862, %v1830, %v1157
      %v1864 = vsel %vm1862, %v1831, %v1159
      %v1865 = vsel %vm1862, %v1832, %v1161
      %v1866 = vsel %vm1862, %v1833, %v1163
      %v1867 = vsel %vm1862, %v1834, %v1165
      %v1868 = vsel %vm1862, %v1835, %v1167
      %v1869 = vsel %vm1862, %v1836, %v1169
      %v1870 = vsel %vm1862, %v1837, %v1171
      %v1871 = vsel %vm1862, %v1838, %v1173
      %v1872 = vsel %vm1862, %v1839, %v1175
      %v1873 = vsel %vm1862, %v1840, %v1177
      %v1874 = vsel %vm1862, %v1841, %v1179
      %v1875 = vsel %vm1862, %v1842, %v1181
      %v1876 = vsel %vm1862, %v1843, %v1183
      %v1877 = vsel %vm1862, %v1844, %v1185
      %v1878 = vsel %vm1862, %v1845, %v1187
      %v1879 = vsel %vm1862, %v1846, %v1189
      %v1880 = vsel %vm1862, %v1847, %v1191
      %v1881 = vsel %vm1862, %v1848, %v1193
      %v1882 = vsel %vm1862, %v1849, %v1195
      %v1883 = vsel %vm1862, %v1850, %v1197
      %v1884 = vsel %vm1862, %v1851, %v1199
      %v1885 = vsel %vm1862, %v1852, %v1201
      %v1886 = vsel %vm1862, %v1853, %v1203
      %v1887 = vsel %vm1862, %v1854, %v1205
      %v1888 = vsel %vm1862, %v1855, %v1207
      %v1889 = vsel %vm1862, %v1856, %v1209
      %v1890 = vsel %vm1862, %v1857, %v1211
      %v1891 = vsel %vm1862, %v1858, %v1213
      %v1892 = vsel %vm1862, %v1859, %v1215
      %v1893 = vsel %vm1862, %v1860, %v1217
      %v1894 = vsel %vm1862, %v1861, %v1219
      %vm1895 = vcmask 326656
      %v1896 = vsel %vm1895, %v1863, %v1285
      %v1897 = vsel %vm1895, %v1864, %v1287
      %v1898 = vsel %vm1895, %v1865, %v1289
      %v1899 = vsel %vm1895, %v1866, %v1291
      %v1900 = vsel %vm1895, %v1867, %v1293
      %v1901 = vsel %vm1895, %v1868, %v1295
      %v1902 = vsel %vm1895, %v1869, %v1297
      %v1903 = vsel %vm1895, %v1870, %v1299
      %v1904 = vsel %vm1895, %v1871, %v1301
      %v1905 = vsel %vm1895, %v1872, %v1303
      %v1906 = vsel %vm1895, %v1873, %v1305
      %v1907 = vsel %vm1895, %v1874, %v1307
      %v1908 = vsel %vm1895, %v1875, %v1309
      %v1909 = vsel %vm1895, %v1876, %v1311
      %v1910 = vsel %vm1895, %v1877, %v1313
      %v1911 = vsel %vm1895, %v1878, %v1315
      %v1912 = vsel %vm1895, %v1879, %v1317
      %v1913 = vsel %vm1895, %v1880, %v1319
      %v1914 = vsel %vm1895, %v1881, %v1321
      %v1915 = vsel %vm1895, %v1882, %v1323
      %v1916 = vsel %vm1895, %v1883, %v1325
      %v1917 = vsel %vm1895, %v1884, %v1327
      %v1918 = vsel %vm1895, %v1885, %v1329
      %v1919 = vsel %vm1895, %v1886, %v1331
      %v1920 = vsel %vm1895, %v1887, %v1333
      %v1921 = vsel %vm1895, %v1888, %v1335
      %v1922 = vsel %vm1895, %v1889, %v1337
      %v1923 = vsel %vm1895, %v1890, %v1339
      %v1924 = vsel %vm1895, %v1891, %v1341
      %v1925 = vsel %vm1895, %v1892, %v1343
      %v1926 = vsel %vm1895, %v1893, %v1345
      %v1927 = vsel %vm1895, %v1894, %v1347
      %vm1928 = vcmask 392192
      %v1929 = vsel %vm1928, %v1896, %v1413
      %v1930 = vsel %vm1928, %v1897, %v1415
      %v1931 = vsel %vm1928, %v1898, %v1417
      %v1932 = vsel %vm1928, %v1899, %v1419
      %v1933 = vsel %vm1928, %v1900, %v1421
      %v1934 = vsel %vm1928, %v1901, %v1423
      %v1935 = vsel %vm1928, %v1902, %v1425
      %v1936 = vsel %vm1928, %v1903, %v1427
      %v1937 = vsel %vm1928, %v1904, %v1429
      %v1938 = vsel %vm1928, %v1905, %v1431
      %v1939 = vsel %vm1928, %v1906, %v1433
      %v1940 = vsel %vm1928, %v1907, %v1435
      %v1941 = vsel %vm1928, %v1908, %v1437
      %v1942 = vsel %vm1928, %v1909, %v1439
      %v1943 = vsel %vm1928, %v1910, %v1441
      %v1944 = vsel %vm1928, %v1911, %v1443
      %v1945 = vsel %vm1928, %v1912, %v1445
      %v1946 = vsel %vm1928, %v1913, %v1447
      %v1947 = vsel %vm1928, %v1914, %v1449
      %v1948 = vsel %vm1928, %v1915, %v1451
      %v1949 = vsel %vm1928, %v1916, %v1453
      %v1950 = vsel %vm1928, %v1917, %v1455
      %v1951 = vsel %vm1928, %v1918, %v1457
      %v1952 = vsel %vm1928, %v1919, %v1459
      %v1953 = vsel %vm1928, %v1920, %v1461
      %v1954 = vsel %vm1928, %v1921, %v1463
      %v1955 = vsel %vm1928, %v1922, %v1465
      %v1956 = vsel %vm1928, %v1923, %v1467
      %v1957 = vsel %vm1928, %v1924, %v1469
      %v1958 = vsel %vm1928, %v1925, %v1471
      %v1959 = vsel %vm1928, %v1926, %v1473
      %v1960 = vsel %vm1928, %v1927, %v1475
      %vm1961 = vcmask 457728
      %v1962 = vsel %vm1961, %v1929, %v1541
      %v1963 = vsel %vm1961, %v1930, %v1543
      %v1964 = vsel %vm1961, %v1931, %v1545
      %v1965 = vsel %vm1961, %v1932, %v1547
      %v1966 = vsel %vm1961, %v1933, %v1549
      %v1967 = vsel %vm1961, %v1934, %v1551
      %v1968 = vsel %vm1961, %v1935, %v1553
      %v1969 = vsel %vm1961, %v1936, %v1555
      %v1970 = vsel %vm1961, %v1937, %v1557
      %v1971 = vsel %vm1961, %v1938, %v1559
      %v1972 = vsel %vm1961, %v1939, %v1561
      %v1973 = vsel %vm1961, %v1940, %v1563
      %v1974 = vsel %vm1961, %v1941, %v1565
      %v1975 = vsel %vm1961, %v1942, %v1567
      %v1976 = vsel %vm1961, %v1943, %v1569
      %v1977 = vsel %vm1961, %v1944, %v1571
      %v1978 = vsel %vm1961, %v1945, %v1573
      %v1979 = vsel %vm1961, %v1946, %v1575
      %v1980 = vsel %vm1961, %v1947, %v1577
      %v1981 = vsel %vm1961, %v1948, %v1579
      %v1982 = vsel %vm1961, %v1949, %v1581
      %v1983 = vsel %vm1961, %v1950, %v1583
      %v1984 = vsel %vm1961, %v1951, %v1585
      %v1985 = vsel %vm1961, %v1952, %v1587
      %v1986 = vsel %vm1961, %v1953, %v1589
      %v1987 = vsel %vm1961, %v1954, %v1591
      %v1988 = vsel %vm1961, %v1955, %v1593
      %v1989 = vsel %vm1961, %v1956, %v1595
      %v1990 = vsel %vm1961, %v1957, %v1597
      %v1991 = vsel %vm1961, %v1958, %v1599
      %v1992 = vsel %vm1961, %v1959, %v1601
      %v1993 = vsel %vm1961, %v1960, %v1603
      %vm1994 = vcmask 523264
      %v1995 = vsel %vm1994, %v1962, %v1669
      %v1996 = vsel %vm1994, %v1963, %v1671
      %v1997 = vsel %vm1994, %v1964, %v1673
      %v1998 = vsel %vm1994, %v1965, %v1675
      %v1999 = vsel %vm1994, %v1966, %v1677
      %v2000 = vsel %vm1994, %v1967, %v1679
      %v2001 = vsel %vm1994, %v1968, %v1681
      %v2002 = vsel %vm1994, %v1969, %v1683
      %v2003 = vsel %vm1994, %v1970, %v1685
      %v2004 = vsel %vm1994, %v1971, %v1687
      %v2005 = vsel %vm1994, %v1972, %v1689
      %v2006 = vsel %vm1994, %v1973, %v1691
      %v2007 = vsel %vm1994, %v1974, %v1693
      %v2008 = vsel %vm1994, %v1975, %v1695
      %v2009 = vsel %vm1994, %v1976, %v1697
      %v2010 = vsel %vm1994, %v1977, %v1699
      %v2011 = vsel %vm1994, %v1978, %v1701
      %v2012 = vsel %vm1994, %v1979, %v1703
      %v2013 = vsel %vm1994, %v1980, %v1705
      %v2014 = vsel %vm1994, %v1981, %v1707
      %v2015 = vsel %vm1994, %v1982, %v1709
      %v2016 = vsel %vm1994, %v1983, %v1711
      %v2017 = vsel %vm1994, %v1984, %v1713
      %v2018 = vsel %vm1994, %v1985, %v1715
      %v2019 = vsel %vm1994, %v1986, %v1717
      %v2020 = vsel %vm1994, %v1987, %v1719
      %v2021 = vsel %vm1994, %v1988, %v1721
      %v2022 = vsel %vm1994, %v1989, %v1723
      %v2023 = vsel %vm1994, %v1990, %v1725
      %v2024 = vsel %vm1994, %v1991, %v1727
      %v2025 = vsel %vm1994, %v1992, %v1729
      %v2026 = vsel %vm1994, %v1993, %v1731
      %v2027 = vpack.c.bf16 %v1996, %v1995
      %v2028 = vpack.c.bf16 %v1998, %v1997
      %v2029 = vpack.c.bf16 %v2000, %v1999
      %v2030 = vpack.c.bf16 %v2002, %v2001
      %v2031 = vpack.c.bf16 %v2004, %v2003
      %v2032 = vpack.c.bf16 %v2006, %v2005
      %v2033 = vpack.c.bf16 %v2008, %v2007
      %v2034 = vpack.c.bf16 %v2010, %v2009
      %v2035 = vpack.c.bf16 %v2012, %v2011
      %v2036 = vpack.c.bf16 %v2014, %v2013
      %v2037 = vpack.c.bf16 %v2016, %v2015
      %v2038 = vpack.c.bf16 %v2018, %v2017
      %v2039 = vpack.c.bf16 %v2020, %v2019
      %v2040 = vpack.c.bf16 %v2022, %v2021
      %v2041 = vpack.c.bf16 %v2024, %v2023
      %v2042 = vpack.c.bf16 %v2026, %v2025
      %v2043 = vld [vmem:[%s1] sm:$0xf]
      %v2044 = vld [vmem:[%s1 + $0x4] sm:$0xf]
      %v2045 = vld [vmem:[%s1 + $0x8] sm:$0xf]
      %v2046 = vld [vmem:[%s1 + $0xc] sm:$0xf]
      %v2047 = vld [vmem:[%s1 + $0x10] sm:$0xf]
      %v2048 = vld [vmem:[%s1 + $0x14] sm:$0xf]
      %v2049 = vld [vmem:[%s1 + $0x18] sm:$0xf]
      %v2050 = vld [vmem:[%s1 + $0x1c] sm:$0xf]
      %v2051 = vld [vmem:[%s1 + $0x20] sm:$0xf]
      %v2061 = vunpack.c.l.b16 %v2043
      %v2062 = vunpack.c.l.b16 %v2044
      %v2063 = vunpack.c.l.b16 %v2045
      %v2064 = vunpack.c.l.b16 %v2046
      %v2065 = vunpack.c.l.b16 %v2047
      %v2066 = vunpack.c.l.b16 %v2048
      %v2067 = vunpack.c.l.b16 %v2049
      %v2068 = vunpack.c.l.b16 %v2050
      %v2069 = vunpack.c.l.b16 %v2051
      %v2070 = vpack.c.b16 %v2062, %v2061
      %v2071 = vpack.c.b16 %v2064, %v2063
      %v2072 = vpack.c.b16 %v2066, %v2065
      %v2073 = vpack.c.b16 %v2068, %v2067
      %v2074 = vpack.c.b16 %v2069, %v2069
      %vm2079 = vcmask 588800
      %v2081 = vsel %vm2079, %v2027, 0
      %v2084 = vsel %vm2079, %v2028, 0
      %v2087 = vsel %vm2079, %v2029, 0
      %v2090 = vsel %vm2079, %v2030, 0
      %v2093 = vsel %vm2079, %v2031, 0
      %v2096 = vsel %vm2079, %v2032, 0
      %v2099 = vsel %vm2079, %v2033, 0
      %v2102 = vsel %vm2079, %v2034, 0
      %v2105 = vsel %vm2079, %v2035, 0
      %v2108 = vsel %vm2079, %v2036, 0
      %v2111 = vsel %vm2079, %v2037, 0
      %v2114 = vsel %vm2079, %v2038, 0
      %v2117 = vsel %vm2079, %v2039, 0
      %v2120 = vsel %vm2079, %v2040, 0
      %v2123 = vsel %vm2079, %v2041, 0
      %v2126 = vsel %vm2079, %v2042, 0
      %vm2128 = vcmask 1043456
      %v2130 = vsel %vm2128, %v2074, 0
      %2132 = vmatprep.subr.bf16.mxu0 0
      %2133 = vmatpush1.bf16.msra.mxu0 0
      %2134 = vmatprep.subr.bf16.mxu0 0
      %2135 = vmatpush1.bf16.msra.mxu0 0
      %2136 = vmatprep.subr.bf16.mxu0 0
      %2137 = vmatpush1.bf16.msra.mxu0 0
      %2138 = vmatprep.subr.bf16.mxu0 0
      %2139 = vmatpush1.bf16.msra.mxu0 %v2130
      %2140 = vmatprep.subr.bf16.mxu0 0
      %2141 = vmatpush1.bf16.msra.mxu0 %v2073
      %2142 = vmatprep.subr.bf16.mxu0 0
      %2143 = vmatpush1.bf16.msra.mxu0 %v2072
      %2144 = vmatprep.subr.bf16.mxu0 0
      %2145 = vmatpush1.bf16.msra.mxu0 %v2071
      %2146 = vmatprep.subr.bf16.mxu0 0
      %2147 = vmatpush1.bf16.msra.mxu0 %v2070
      %2148 = vmatprep.subr.bf16.mxu0 0
      %2149 = vmatpush2.bf16.msra.mxu0 0
      %2150 = vmatprep.subr.bf16.mxu0 0
      %2151 = vmatpush2.bf16.msra.mxu0 0
      %2152 = vmatprep.subr.bf16.mxu0 0
      %2153 = vmatpush2.bf16.msra.mxu0 0
      %2154 = vmatprep.subr.bf16.mxu0 0
      %2155 = vmatpush2.bf16.msra.mxu0 0
      %2156 = vmatprep.subr.bf16.mxu0 0
      %2157 = vmatpush2.bf16.msra.mxu0 0
      %2158 = vmatprep.subr.bf16.mxu0 0
      %2159 = vmatpush2.bf16.msra.mxu0 0
      %2160 = vmatprep.subr.bf16.mxu0 0
      %2161 = vmatpush2.bf16.msra.mxu0 0
      %2162 = vmatprep.subr.bf16.mxu0 0
      %2163 = vmatpush2.bf16.msra.mxu0 0
      %2164 = vmatprep.mubr.bf16.mxu0 0
      %2165 = vmatmul.mubr.bf16.gmra.mxu0 %v2081
      %v2166 = vpop.f32.mrf.mxu0
      %v2167 = vadd.f32 0.0, %v2166
      %v2168 = vpop.f32.mrf.mxu0
      %v2169 = vpop.f32.mrf.mxu0
      %v2170 = vadd.f32 0.0, %v2169
      %v2171 = vpop.f32.mrf.mxu0
      %2172 = vmatprep.mubr.bf16.mxu0 0
      %2173 = vmatmul.mubr.bf16.gmra.mxu0 %v2084
      %v2174 = vpop.f32.mrf.mxu0
      %v2175 = vadd.f32 0.0, %v2174
      %v2176 = vpop.f32.mrf.mxu0
      %v2177 = vpop.f32.mrf.mxu0
      %v2178 = vadd.f32 0.0, %v2177
      %v2179 = vpop.f32.mrf.mxu0
      %2180 = vmatprep.mubr.bf16.mxu0 0
      %2181 = vmatmul.mubr.bf16.gmra.mxu0 %v2087
      %v2182 = vpop.f32.mrf.mxu0
      %v2183 = vadd.f32 0.0, %v2182
      %v2184 = vpop.f32.mrf.mxu0
      %v2185 = vpop.f32.mrf.mxu0
      %v2186 = vadd.f32 0.0, %v2185
      %v2187 = vpop.f32.mrf.mxu0
      %2188 = vmatprep.mubr.bf16.mxu0 0
      %2189 = vmatmul.mubr.bf16.gmra.mxu0 %v2090
      %v2190 = vpop.f32.mrf.mxu0
      %v2191 = vadd.f32 0.0, %v2190
      %v2192 = vpop.f32.mrf.mxu0
      %v2193 = vpop.f32.mrf.mxu0
      %v2194 = vadd.f32 0.0, %v2193
      %v2195 = vpop.f32.mrf.mxu0
      %2196 = vmatprep.mubr.bf16.mxu0 0
      %2197 = vmatmul.mubr.bf16.gmra.mxu0 %v2093
      %v2198 = vpop.f32.mrf.mxu0
      %v2199 = vadd.f32 0.0, %v2198
      %v2200 = vpop.f32.mrf.mxu0
      %v2201 = vpop.f32.mrf.mxu0
      %v2202 = vadd.f32 0.0, %v2201
      %v2203 = vpop.f32.mrf.mxu0
      %2204 = vmatprep.mubr.bf16.mxu0 0
      %2205 = vmatmul.mubr.bf16.gmra.mxu0 %v2096
      %v2206 = vpop.f32.mrf.mxu0
      %v2207 = vadd.f32 0.0, %v2206
      %v2208 = vpop.f32.mrf.mxu0
      %v2209 = vpop.f32.mrf.mxu0
      %v2210 = vadd.f32 0.0, %v2209
      %v2211 = vpop.f32.mrf.mxu0
      %2212 = vmatprep.mubr.bf16.mxu0 0
      %2213 = vmatmul.mubr.bf16.gmra.mxu0 %v2099
      %v2214 = vpop.f32.mrf.mxu0
      %v2215 = vadd.f32 0.0, %v2214
      %v2216 = vpop.f32.mrf.mxu0
      %v2217 = vpop.f32.mrf.mxu0
      %v2218 = vadd.f32 0.0, %v2217
      %v2219 = vpop.f32.mrf.mxu0
      %2220 = vmatprep.mubr.bf16.mxu0 0
      %2221 = vmatmul.mubr.bf16.gmra.mxu0 %v2102
      %v2222 = vpop.f32.mrf.mxu0
      %v2223 = vadd.f32 0.0, %v2222
      %v2224 = vpop.f32.mrf.mxu0
      %v2225 = vpop.f32.mrf.mxu0
      %v2226 = vadd.f32 0.0, %v2225
      %v2227 = vpop.f32.mrf.mxu0
      %2228 = vmatprep.mubr.bf16.mxu0 0
      %2229 = vmatmul.mubr.bf16.gmra.mxu0 %v2105
      %v2230 = vpop.f32.mrf.mxu0
      %v2231 = vadd.f32 0.0, %v2230
      %v2232 = vpop.f32.mrf.mxu0
      %v2233 = vpop.f32.mrf.mxu0
      %v2234 = vadd.f32 0.0, %v2233
      %v2235 = vpop.f32.mrf.mxu0
      %2236 = vmatprep.mubr.bf16.mxu0 0
      %2237 = vmatmul.mubr.bf16.gmra.mxu0 %v2108
      %v2238 = vpop.f32.mrf.mxu0
      %v2239 = vadd.f32 0.0, %v2238
      %v2240 = vpop.f32.mrf.mxu0
      %v2241 = vpop.f32.mrf.mxu0
      %v2242 = vadd.f32 0.0, %v2241
      %v2243 = vpop.f32.mrf.mxu0
      %2244 = vmatprep.mubr.bf16.mxu0 0
      %2245 = vmatmul.mubr.bf16.gmra.mxu0 %v2111
      %v2246 = vpop.f32.mrf.mxu0
      %v2247 = vadd.f32 0.0, %v2246
      %v2248 = vpop.f32.mrf.mxu0
      %v2249 = vpop.f32.mrf.mxu0
      %v2250 = vadd.f32 0.0, %v2249
      %v2251 = vpop.f32.mrf.mxu0
      %2252 = vmatprep.mubr.bf16.mxu0 0
      %2253 = vmatmul.mubr.bf16.gmra.mxu0 %v2114
      %v2254 = vpop.f32.mrf.mxu0
      %v2255 = vadd.f32 0.0, %v2254
      %v2256 = vpop.f32.mrf.mxu0
      %v2257 = vpop.f32.mrf.mxu0
      %v2258 = vadd.f32 0.0, %v2257
      %v2259 = vpop.f32.mrf.mxu0
      %2260 = vmatprep.mubr.bf16.mxu0 0
      %2261 = vmatmul.mubr.bf16.gmra.mxu0 %v2117
      %v2262 = vpop.f32.mrf.mxu0
      %v2263 = vadd.f32 0.0, %v2262
      %v2264 = vpop.f32.mrf.mxu0
      %v2265 = vpop.f32.mrf.mxu0
      %v2266 = vadd.f32 0.0, %v2265
      %v2267 = vpop.f32.mrf.mxu0
      %2268 = vmatprep.mubr.bf16.mxu0 0
      %2269 = vmatmul.mubr.bf16.gmra.mxu0 %v2120
      %v2270 = vpop.f32.mrf.mxu0
      %v2271 = vadd.f32 0.0, %v2270
      %v2272 = vpop.f32.mrf.mxu0
      %v2273 = vpop.f32.mrf.mxu0
      %v2274 = vadd.f32 0.0, %v2273
      %v2275 = vpop.f32.mrf.mxu0
      %2276 = vmatprep.mubr.bf16.mxu0 0
      %2277 = vmatmul.mubr.bf16.gmra.mxu0 %v2123
      %v2278 = vpop.f32.mrf.mxu0
      %v2279 = vadd.f32 0.0, %v2278
      %v2280 = vpop.f32.mrf.mxu0
      %v2281 = vpop.f32.mrf.mxu0
      %v2282 = vadd.f32 0.0, %v2281
      %v2283 = vpop.f32.mrf.mxu0
      %2284 = vmatprep.mubr.bf16.mxu0 0
      %2285 = vmatmul.mubr.bf16.gmra.mxu0 %v2126
      %v2286 = vpop.f32.mrf.mxu0
      %v2287 = vadd.f32 0.0, %v2286
      %v2288 = vpop.f32.mrf.mxu0
      %v2289 = vpop.f32.mrf.mxu0
      %v2290 = vadd.f32 0.0, %v2289
      %v2291 = vpop.f32.mrf.mxu0
      %2292 = vdwg.mxu0
      %v2293 = vpack.c.bf16 %v2170, %v2167
      %v2294 = vpack.c.bf16 %v2178, %v2175
      %v2295 = vpack.c.bf16 %v2186, %v2183
      %v2296 = vpack.c.bf16 %v2194, %v2191
      %v2297 = vpack.c.bf16 %v2202, %v2199
      %v2298 = vpack.c.bf16 %v2210, %v2207
      %v2299 = vpack.c.bf16 %v2218, %v2215
      %v2300 = vpack.c.bf16 %v2226, %v2223
      %v2301 = vpack.c.bf16 %v2234, %v2231
      %v2302 = vpack.c.bf16 %v2242, %v2239
      %v2303 = vpack.c.bf16 %v2250, %v2247
      %v2304 = vpack.c.bf16 %v2258, %v2255
      %v2305 = vpack.c.bf16 %v2266, %v2263
      %v2306 = vpack.c.bf16 %v2274, %v2271
      %v2307 = vpack.c.bf16 %v2282, %v2279
      %v2308 = vpack.c.bf16 %v2290, %v2287
      %v2325 = vunpack.c.l.b16 %v2293
      %v2326 = vunpack.c.h.b16 %v2293
      %v2327 = vunpack.c.l.b16 %v2294
      %v2328 = vunpack.c.h.b16 %v2294
      %v2329 = vunpack.c.l.b16 %v2295
      %v2330 = vunpack.c.h.b16 %v2295
      %v2331 = vunpack.c.l.b16 %v2296
      %v2332 = vunpack.c.h.b16 %v2296
      %v2333 = vunpack.c.l.b16 %v2297
      %v2334 = vunpack.c.h.b16 %v2297
      %v2335 = vunpack.c.l.b16 %v2298
      %v2336 = vunpack.c.h.b16 %v2298
      %v2337 = vunpack.c.l.b16 %v2299
      %v2338 = vunpack.c.h.b16 %v2299
      %v2339 = vunpack.c.l.b16 %v2300
      %v2340 = vunpack.c.h.b16 %v2300
      %v2341 = vunpack.c.l.b16 %v2301
      %v2342 = vunpack.c.h.b16 %v2301
      %v2343 = vunpack.c.l.b16 %v2302
      %v2344 = vunpack.c.h.b16 %v2302
      %v2345 = vunpack.c.l.b16 %v2303
      %v2346 = vunpack.c.h.b16 %v2303
      %v2347 = vunpack.c.l.b16 %v2304
      %v2348 = vunpack.c.h.b16 %v2304
      %v2349 = vunpack.c.l.b16 %v2305
      %v2350 = vunpack.c.h.b16 %v2305
      %v2351 = vunpack.c.l.b16 %v2306
      %v2352 = vunpack.c.h.b16 %v2306
      %v2353 = vunpack.c.l.b16 %v2307
      %v2354 = vunpack.c.h.b16 %v2307
      %v2355 = vunpack.c.l.b16 %v2308
      %v2356 = vunpack.c.h.b16 %v2308
      %v2357 = vpack.c.b16 %v2325, %v2325
      %v2358 = vpack.c.b16 %v2326, %v2326
      %v2359 = vpack.c.b16 %v2327, %v2327
      %v2360 = vpack.c.b16 %v2328, %v2328
      %v2361 = vpack.c.b16 %v2329, %v2329
      %v2362 = vpack.c.b16 %v2330, %v2330
      %v2363 = vpack.c.b16 %v2331, %v2331
      %v2364 = vpack.c.b16 %v2332, %v2332
      %v2365 = vpack.c.b16 %v2333, %v2333
      %v2366 = vpack.c.b16 %v2334, %v2334
      %v2367 = vpack.c.b16 %v2335, %v2335
      %v2368 = vpack.c.b16 %v2336, %v2336
      %v2369 = vpack.c.b16 %v2337, %v2337
      %v2370 = vpack.c.b16 %v2338, %v2338
      %v2371 = vpack.c.b16 %v2339, %v2339
      %v2372 = vpack.c.b16 %v2340, %v2340
      %v2373 = vpack.c.b16 %v2341, %v2341
      %v2374 = vpack.c.b16 %v2342, %v2342
      %v2375 = vpack.c.b16 %v2343, %v2343
      %v2376 = vpack.c.b16 %v2344, %v2344
      %v2377 = vpack.c.b16 %v2345, %v2345
      %v2378 = vpack.c.b16 %v2346, %v2346
      %v2379 = vpack.c.b16 %v2347, %v2347
      %v2380 = vpack.c.b16 %v2348, %v2348
      %v2381 = vpack.c.b16 %v2349, %v2349
      %v2382 = vpack.c.b16 %v2350, %v2350
      %v2383 = vpack.c.b16 %v2351, %v2351
      %v2384 = vpack.c.b16 %v2352, %v2352
      %v2385 = vpack.c.b16 %v2353, %v2353
      %v2386 = vpack.c.b16 %v2354, %v2354
      %v2387 = vpack.c.b16 %v2355, %v2355
      %v2388 = vpack.c.b16 %v2356, %v2356
      %vm2421 = vcmask 60416
      %2422 = vst.msk [vmem:[%s192] sm:$0xf] %vm2421, %v2357
      %2423 = vst.msk [vmem:[%s192 + $0x4] sm:$0xf] %vm2421, %v2358
      %2424 = vst.msk [vmem:[%s192 + $0x8] sm:$0xf] %vm2421, %v2359
      %2425 = vst.msk [vmem:[%s192 + $0xc] sm:$0xf] %vm2421, %v2360
      %2426 = vst.msk [vmem:[%s192 + $0x10] sm:$0xf] %vm2421, %v2361
      %2427 = vst.msk [vmem:[%s192 + $0x14] sm:$0xf] %vm2421, %v2362
      %2428 = vst.msk [vmem:[%s192 + $0x18] sm:$0xf] %vm2421, %v2363
      %2429 = vst.msk [vmem:[%s192 + $0x1c] sm:$0xf] %vm2421, %v2364
      %2430 = vst.msk [vmem:[%s192 + $0x20] sm:$0xf] %vm2421, %v2365
      %2431 = vst.msk [vmem:[%s192 + $0x24] sm:$0xf] %vm2421, %v2366
      %2432 = vst.msk [vmem:[%s192 + $0x28] sm:$0xf] %vm2421, %v2367
      %2433 = vst.msk [vmem:[%s192 + $0x2c] sm:$0xf] %vm2421, %v2368
      %2434 = vst.msk [vmem:[%s192 + $0x30] sm:$0xf] %vm2421, %v2369
      %2435 = vst.msk [vmem:[%s192 + $0x34] sm:$0xf] %vm2421, %v2370
      %2436 = vst.msk [vmem:[%s192 + $0x38] sm:$0xf] %vm2421, %v2371
      %2437 = vst.msk [vmem:[%s192 + $0x3c] sm:$0xf] %vm2421, %v2372
      %2438 = vst.msk [vmem:[%s192 + $0x40] sm:$0xf] %vm2421, %v2373
      %2439 = vst.msk [vmem:[%s192 + $0x44] sm:$0xf] %vm2421, %v2374
      %2440 = vst.msk [vmem:[%s192 + $0x48] sm:$0xf] %vm2421, %v2375
      %2441 = vst.msk [vmem:[%s192 + $0x4c] sm:$0xf] %vm2421, %v2376
      %2442 = vst.msk [vmem:[%s192 + $0x50] sm:$0xf] %vm2421, %v2377
      %2443 = vst.msk [vmem:[%s192 + $0x54] sm:$0xf] %vm2421, %v2378
      %2444 = vst.msk [vmem:[%s192 + $0x58] sm:$0xf] %vm2421, %v2379
      %2445 = vst.msk [vmem:[%s192 + $0x5c] sm:$0xf] %vm2421, %v2380
      %2446 = vst.msk [vmem:[%s192 + $0x60] sm:$0xf] %vm2421, %v2381
      %2447 = vst.msk [vmem:[%s192 + $0x64] sm:$0xf] %vm2421, %v2382
      %2448 = vst.msk [vmem:[%s192 + $0x68] sm:$0xf] %vm2421, %v2383
      %2449 = vst.msk [vmem:[%s192 + $0x6c] sm:$0xf] %vm2421, %v2384
      %2450 = vst.msk [vmem:[%s192 + $0x70] sm:$0xf] %vm2421, %v2385
      %2451 = vst.msk [vmem:[%s192 + $0x74] sm:$0xf] %vm2421, %v2386
      %2452 = vst.msk [vmem:[%s192 + $0x78] sm:$0xf] %vm2421, %v2387
      %2453 = vst.msk [vmem:[%s192 + $0x7c] sm:$0xf] %vm2421, %v2388
      %v2454 = vld [vmem:[%s3] sm:$0x1]
      %v2455 = vsel %vm418, %v2167, 0.0
      %v2456 = vsel %vm418, %v2170, 0.0
      %v2457 = vadd.f32 %v2455, %v2456
      %v2458 = vsel %vm418, %v2175, 0.0
      %v2459 = vadd.f32 %v2457, %v2458
      %v2460 = vsel %vm418, %v2178, 0.0
      %v2461 = vadd.f32 %v2459, %v2460
      %v2462 = vsel %vm418, %v2183, 0.0
      %v2463 = vadd.f32 %v2461, %v2462
      %v2464 = vsel %vm418, %v2186, 0.0
      %v2465 = vadd.f32 %v2463, %v2464
      %v2466 = vsel %vm418, %v2191, 0.0
      %v2467 = vadd.f32 %v2465, %v2466
      %v2468 = vsel %vm418, %v2194, 0.0
      %v2469 = vadd.f32 %v2467, %v2468
      %v2470 = vsel %vm418, %v2199, 0.0
      %v2471 = vadd.f32 %v2469, %v2470
      %v2472 = vsel %vm418, %v2202, 0.0
      %v2473 = vadd.f32 %v2471, %v2472
      %v2474 = vsel %vm418, %v2207, 0.0
      %v2475 = vadd.f32 %v2473, %v2474
      %v2476 = vsel %vm418, %v2210, 0.0
      %v2477 = vadd.f32 %v2475, %v2476
      %v2478 = vsel %vm418, %v2215, 0.0
      %v2479 = vadd.f32 %v2477, %v2478
      %v2480 = vsel %vm418, %v2218, 0.0
      %v2481 = vadd.f32 %v2479, %v2480
      %v2482 = vsel %vm418, %v2223, 0.0
      %v2483 = vadd.f32 %v2481, %v2482
      %v2484 = vsel %vm418, %v2226, 0.0
      %v2485 = vadd.f32 %v2483, %v2484
      %v2486 = vsel %vm418, %v2231, 0.0
      %v2487 = vadd.f32 %v2485, %v2486
      %v2488 = vsel %vm418, %v2234, 0.0
      %v2489 = vadd.f32 %v2487, %v2488
      %v2490 = vsel %vm418, %v2239, 0.0
      %v2491 = vadd.f32 %v2489, %v2490
      %v2492 = vsel %vm418, %v2242, 0.0
      %v2493 = vadd.f32 %v2491, %v2492
      %v2494 = vsel %vm418, %v2247, 0.0
      %v2495 = vadd.f32 %v2493, %v2494
      %v2496 = vsel %vm418, %v2250, 0.0
      %v2497 = vadd.f32 %v2495, %v2496
      %v2498 = vsel %vm418, %v2255, 0.0
      %v2499 = vadd.f32 %v2497, %v2498
      %v2500 = vsel %vm418, %v2258, 0.0
      %v2501 = vadd.f32 %v2499, %v2500
      %v2502 = vsel %vm418, %v2263, 0.0
      %v2503 = vadd.f32 %v2501, %v2502
      %v2504 = vsel %vm418, %v2266, 0.0
      %v2505 = vadd.f32 %v2503, %v2504
      %v2506 = vsel %vm418, %v2271, 0.0
      %v2507 = vadd.f32 %v2505, %v2506
      %v2508 = vsel %vm418, %v2274, 0.0
      %v2509 = vadd.f32 %v2507, %v2508
      %v2510 = vsel %vm418, %v2279, 0.0
      %v2511 = vadd.f32 %v2509, %v2510
      %v2512 = vsel %vm418, %v2282, 0.0
      %v2513 = vadd.f32 %v2511, %v2512
      %v2514 = vsel %vm418, %v2287, 0.0
      %v2515 = vadd.f32 %v2513, %v2514
      %v2516 = vsel %vm418, %v2290, 0.0
      %v2517 = vadd.f32 %v2515, %v2516
      %v2518 = vrot.slane %v2517, 4
      %v2519 = vadd.f32 %v2517, %v2518
      %v2520 = vrot.slane %v2519, 2
      %v2521 = vadd.f32 %v2519, %v2520
      %v2522 = vrot.slane %v2521, 1
      %v2523 = vadd.f32 %v2521, %v2522
      %v2524 = vadd.f32 %v2454, %v2523
      %vm2525 = vcmask 57344
      %2526 = vst.msk [vmem:[%s3] sm:$0x1] %vm2525, %v2524
      %v2527 = vld [vmem:[%s4] sm:$0x1]
      %v2528 = vmul.f32 %v2167, %v2167
      %v2529 = vmul.f32 %v2170, %v2170
      %v2530 = vmul.f32 %v2175, %v2175
      %v2531 = vmul.f32 %v2178, %v2178
      %v2532 = vmul.f32 %v2183, %v2183
      %v2533 = vmul.f32 %v2186, %v2186
      %v2534 = vmul.f32 %v2191, %v2191
      %v2535 = vmul.f32 %v2194, %v2194
      %v2536 = vmul.f32 %v2199, %v2199
      %v2537 = vmul.f32 %v2202, %v2202
      %v2538 = vmul.f32 %v2207, %v2207
      %v2539 = vmul.f32 %v2210, %v2210
      %v2540 = vmul.f32 %v2215, %v2215
      %v2541 = vmul.f32 %v2218, %v2218
      %v2542 = vmul.f32 %v2223, %v2223
      %v2543 = vmul.f32 %v2226, %v2226
      %v2544 = vmul.f32 %v2231, %v2231
      %v2545 = vmul.f32 %v2234, %v2234
      %v2546 = vmul.f32 %v2239, %v2239
      %v2547 = vmul.f32 %v2242, %v2242
      %v2548 = vmul.f32 %v2247, %v2247
      %v2549 = vmul.f32 %v2250, %v2250
      %v2550 = vmul.f32 %v2255, %v2255
      %v2551 = vmul.f32 %v2258, %v2258
      %v2552 = vmul.f32 %v2263, %v2263
      %v2553 = vmul.f32 %v2266, %v2266
      %v2554 = vmul.f32 %v2271, %v2271
      %v2555 = vmul.f32 %v2274, %v2274
      %v2556 = vmul.f32 %v2279, %v2279
      %v2557 = vmul.f32 %v2282, %v2282
      %v2558 = vmul.f32 %v2287, %v2287
      %v2559 = vmul.f32 %v2290, %v2290
      %v2560 = vsel %vm418, %v2528, 0.0
      %v2561 = vsel %vm418, %v2529, 0.0
      %v2562 = vadd.f32 %v2560, %v2561
      %v2563 = vsel %vm418, %v2530, 0.0
      %v2564 = vadd.f32 %v2562, %v2563
      %v2565 = vsel %vm418, %v2531, 0.0
      %v2566 = vadd.f32 %v2564, %v2565
      %v2567 = vsel %vm418, %v2532, 0.0
      %v2568 = vadd.f32 %v2566, %v2567
      %v2569 = vsel %vm418, %v2533, 0.0
      %v2570 = vadd.f32 %v2568, %v2569
      %v2571 = vsel %vm418, %v2534, 0.0
      %v2572 = vadd.f32 %v2570, %v2571
      %v2573 = vsel %vm418, %v2535, 0.0
      %v2574 = vadd.f32 %v2572, %v2573
      %v2575 = vsel %vm418, %v2536, 0.0
      %v2576 = vadd.f32 %v2574, %v2575
      %v2577 = vsel %vm418, %v2537, 0.0
      %v2578 = vadd.f32 %v2576, %v2577
      %v2579 = vsel %vm418, %v2538, 0.0
      %v2580 = vadd.f32 %v2578, %v2579
      %v2581 = vsel %vm418, %v2539, 0.0
      %v2582 = vadd.f32 %v2580, %v2581
      %v2583 = vsel %vm418, %v2540, 0.0
      %v2584 = vadd.f32 %v2582, %v2583
      %v2585 = vsel %vm418, %v2541, 0.0
      %v2586 = vadd.f32 %v2584, %v2585
      %v2587 = vsel %vm418, %v2542, 0.0
      %v2588 = vadd.f32 %v2586, %v2587
      %v2589 = vsel %vm418, %v2543, 0.0
      %v2590 = vadd.f32 %v2588, %v2589
      %v2591 = vsel %vm418, %v2544, 0.0
      %v2592 = vadd.f32 %v2590, %v2591
      %v2593 = vsel %vm418, %v2545, 0.0
      %v2594 = vadd.f32 %v2592, %v2593
      %v2595 = vsel %vm418, %v2546, 0.0
      %v2596 = vadd.f32 %v2594, %v2595
      %v2597 = vsel %vm418, %v2547, 0.0
      %v2598 = vadd.f32 %v2596, %v2597
      %v2599 = vsel %vm418, %v2548, 0.0
      %v2600 = vadd.f32 %v2598, %v2599
      %v2601 = vsel %vm418, %v2549, 0.0
      %v2602 = vadd.f32 %v2600, %v2601
      %v2603 = vsel %vm418, %v2550, 0.0
      %v2604 = vadd.f32 %v2602, %v2603
      %v2605 = vsel %vm418, %v2551, 0.0
      %v2606 = vadd.f32 %v2604, %v2605
      %v2607 = vsel %vm418, %v2552, 0.0
      %v2608 = vadd.f32 %v2606, %v2607
      %v2609 = vsel %vm418, %v2553, 0.0
      %v2610 = vadd.f32 %v2608, %v2609
      %v2611 = vsel %vm418, %v2554, 0.0
      %v2612 = vadd.f32 %v2610, %v2611
      %v2613 = vsel %vm418, %v2555, 0.0
      %v2614 = vadd.f32 %v2612, %v2613
      %v2615 = vsel %vm418, %v2556, 0.0
      %v2616 = vadd.f32 %v2614, %v2615
      %v2617 = vsel %vm418, %v2557, 0.0
      %v2618 = vadd.f32 %v2616, %v2617
      %v2619 = vsel %vm418, %v2558, 0.0
      %v2620 = vadd.f32 %v2618, %v2619
      %v2621 = vsel %vm418, %v2559, 0.0
      %v2622 = vadd.f32 %v2620, %v2621
      %v2623 = vrot.slane %v2622, 4
      %v2624 = vadd.f32 %v2622, %v2623
      %v2625 = vrot.slane %v2624, 2
      %v2626 = vadd.f32 %v2624, %v2625
      %v2627 = vrot.slane %v2626, 1
      %v2628 = vadd.f32 %v2626, %v2627
      %v2629 = vadd.f32 %v2527, %v2628
      %2630 = vst.msk [vmem:[%s4] sm:$0x1] %vm2525, %v2629
      %p2631 = scmp.lt.s32.totalorder %s16, 1
      %s2632 = scalar_select %p2631, %s16, 1
      %s2633 = smul.addr %s2632, 32
      %s2634 = smul.addr %s2633, 4
      %s2635 = scalar_lea.vmem %s2, %s2634
      // Predicated region
      $region33: #{basic_block_1w1a.4} parent=27 // pred_check
        %p2636 = pneg %p81
      $region34: #{basic_block_1w1a.4} parent=27 // pred_check_branch
        %2638 = sbr.rel (%p2636) target = $region36
      $region35: #{basic_block_1w1a.4} parent=27 // pred_region
        _
      $region36: #{basic_block_1w1a.4} parent=27 // pred_fallthru
        _
      // Predicated region
      $region37: #{basic_block_1w1a.4} parent=27 // pred_check
        %p2639 = pneg %p102
      $region38: #{basic_block_1w1a.4} parent=27 // pred_check_branch
        %2641 = sbr.rel (%p2639) target = $region40
      $region39: #{basic_block_1w1a.4} parent=27 // pred_region
        _
      $region40: #{basic_block_1w1a.4} parent=27 // pred_fallthru
        _
      // Predicated region
      $region41: #{basic_block_1w1a.4} parent=27 // pred_check
        %p2642 = pneg %p123
      $region42: #{basic_block_1w1a.4} parent=27 // pred_check_branch
        %2644 = sbr.rel (%p2642) target = $region44
      $region43: #{basic_block_1w1a.4} parent=27 // pred_region
        _
      $region44: #{basic_block_1w1a.4} parent=27 // pred_fallthru
        _
      // Predicated region
      $region45: #{basic_block_1w1a.4} parent=27 // pred_check
        %p2645 = pneg %p102
      $region46: #{basic_block_1w1a.4} parent=27 // pred_check_branch
        %2647 = sbr.rel (%p2645) target = $region48
      $region47: #{basic_block_1w1a.4} parent=27 // pred_region
        _
      $region48: #{basic_block_1w1a.4} parent=27 // pred_fallthru
        _
      // Predicated region
      $region49: #{basic_block_1w1a.4} parent=27 // pred_check
        %p2648 = pneg %p123
      $region50: #{basic_block_1w1a.4} parent=27 // pred_check_branch
        %2650 = sbr.rel (%p2648) target = $region52
      $region51: #{basic_block_1w1a.4} parent=27 // pred_region
        _
      $region52: #{basic_block_1w1a.4} parent=27 // pred_fallthru
        _
    $region28: #{basic_block_1w1a.4} parent=5 // pred_fallthru
      _
    %p2651 = scmp.le.s32.totalorder 2, %s11
    // Predicated region
    $region53: #{basic_block_1w1a.4} parent=5 // pred_check
      %p2652 = pneg %p2651
    $region54: #{basic_block_1w1a.4} parent=5 // pred_check_branch
      %2654 = sbr.rel (%p2652) target = $region56
    $region55: #{basic_block_1w1a.4} parent=5 // pred_region
      %s2655 = ssub.s32 %s11, 2
      // Predicated region
      $region57: #{basic_block_1w1a.4} parent=55 // pred_check
        %p2656 = pneg %p87
      $region58: #{basic_block_1w1a.4} parent=55 // pred_check_branch
        %2658 = sbr.rel (%p2656) target = $region60
      $region59: #{basic_block_1w1a.4} parent=55 // pred_region
        %p2659 = scmp.lt.s32.totalorder %s17, 1
        %s2660 = scalar_select %p2659, %s17, 1
        %s2661 = smul.addr %s2660, 32
        %s2662 = smul.addr %s2661, 4
        %s2663 = scalar_lea.vmem %s2, %s2662
      $region60: #{basic_block_1w1a.4} parent=55 // pred_fallthru
        _
    $region56: #{basic_block_1w1a.4} parent=5 // pred_fallthru
      _
  $region6: #{basic_block_1w1a.4} parent=0 // loop_footer
    %s15 = sadd.s32 1, %s11
  $region7: #{basic_block_1w1a.4} parent=0 // loop_footer_branch
    %10 = sbr.rel target = $region3
  $region8: #{basic_block_1w1a.4} parent=0 // loop_exit
    _

</llo_original>
